<compile_context>
chip_gen: v7x
topology: tpu7x:2x2x1
jax: 0.10.0
libtpu: 0.0.40
codegen_flags: <defaults>
</compile_context>

<pallas_src>
import functools

import jax
import jax.numpy as jnp
from jax.experimental import pallas as pl
from jax.experimental.pallas import tpu as pltpu

LANE = 128
BATCH_BLOCK = 128


def _round_up(n, m):
    return ((n + m - 1) // m) * m


def dqn_kernel(x_ref, w1, w2, w3, w4, w5, w6, b_ref, o_ref):
    """One batch tile of the whole MLP; all weights resident in VMEM."""
    w_refs = (w1, w2, w3, w4, w5, w6)
    out_sizes = tuple(int(w.shape[1]) for w in w_refs)

    # Static offsets of each layer's bias inside the packed bias row.
    offsets = []
    off = 0
    for s in out_sizes:
        offsets.append(off)
        off += s

    def linear(h, li):
        size = out_sizes[li]
        o = offsets[li]
        b = b_ref[:, o:o + size]                       # (1, size) f32, static slice
        # bf16 x bf16 on the MXU with f32 accumulation.
        return jnp.dot(h.astype(jnp.bfloat16), w_refs[li][...],
                       preferred_element_type=jnp.float32) + b

    h = x_ref[...]                                      # (bm, n_obs) f32
    h = jnp.maximum(linear(h, 0), 0.0)   # Linear(n_obs, 512) + ReLU  (Dropout = id)
    h = jnp.maximum(linear(h, 1), 0.0)   # Linear(512, 512)   + ReLU  (Dropout = id)
    h = jnp.maximum(linear(h, 2), 0.0)   # Linear(512, 256)   + ReLU  (Dropout = id)
    h = jnp.maximum(linear(h, 3), 0.0)   # Linear(256, 256)   + ReLU
    h = jnp.maximum(linear(h, 4), 0.0)   # Linear(256, 128)   + ReLU  (Dropout = id)
    o_ref[...] = linear(h, 5).astype(o_ref.dtype)       # Linear(128, n_act_pad)


@functools.partial(jax.jit, static_argnames=("n_actions", "batch_block"))
def dqn_forward(x, weights_bf16, bias_packed, *, n_actions, batch_block=BATCH_BLOCK):
    """weights_bf16: 6 bf16 arrays of shape (in, out) (last out lane-padded).
    bias_packed: (1, sum(out)) f32 row. Returns (B, n_actions) f32."""
    B, n_obs = x.shape
    B_pad = _round_up(max(B, 1), batch_block)
    if B_pad != B:
        x = jnp.pad(x, ((0, B_pad - B), (0, 0)))
    n_out_pad = weights_bf16[-1].shape[1]

    grid = (B_pad // batch_block,)

    # Weights & biases: full-array blocks with constant index_map -> stay
    # VMEM-resident across batch grid steps (no re-DMA per tile).
    w_specs = [pl.BlockSpec(tuple(w.shape), lambda i: (0, 0)) for w in weights_bf16]
    in_specs = ([pl.BlockSpec((batch_block, n_obs), lambda i: (i, 0))]
                + w_specs
                + [pl.BlockSpec(tuple(bias_packed.shape), lambda i: (0, 0))])
    out_spec = pl.BlockSpec((batch_block, n_out_pad), lambda i: (i, 0))

    out = pl.pallas_call(
        dqn_kernel,
        out_shape=jax.ShapeDtypeStruct((B_pad, n_out_pad), jnp.float32),
        grid_spec=pltpu.PrefetchScalarGridSpec(
            num_scalar_prefetch=0,
            grid=grid,
            in_specs=in_specs,
            out_specs=out_spec),
        compiler_params=pltpu.CompilerParams(
            dimension_semantics=("parallel",)),
    )(x, *weights_bf16, bias_packed)

    return out[:B, :n_actions]


def init_dqn_params(key, n_observations, n_actions):
    """PyTorch nn.Linear default init: U(-1/sqrt(fan_in), 1/sqrt(fan_in)).
    Weights stored transposed as (in, out); biases as (out,). All f32 "master"
    copies; prepare_params() narrows them for the kernel."""
    sizes = [(n_observations, 512), (512, 512), (512, 256),
             (256, 256), (256, 128), (128, n_actions)]
    params = []
    for (fan_in, fan_out) in sizes:
        key, kw, kb = jax.random.split(key, 3)
        bound = 1.0 / jnp.sqrt(jnp.float32(fan_in))
        w_t = jax.random.uniform(kw, (fan_in, fan_out), jnp.float32, -bound, bound)
        b = jax.random.uniform(kb, (fan_out,), jnp.float32, -bound, bound)
        params.append((w_t, b))
    return params


def prepare_params(params_f32):
    """bf16 weights (last layer lane-padded to 128 cols) + packed f32 bias row."""
    n_layers = len(params_f32)
    weights, biases = [], []
    for li, (w_t, b) in enumerate(params_f32):
        if li == n_layers - 1:
            out_pad = _round_up(w_t.shape[1], LANE)
            w_t = jnp.pad(w_t, ((0, 0), (0, out_pad - w_t.shape[1])))
            b = jnp.pad(b, (0, out_pad - b.shape[0]))
        weights.append(w_t.astype(jnp.bfloat16))
        biases.append(b.astype(jnp.float32))
    bias_packed = jnp.concatenate(biases).reshape(1, -1)   # (1, 1792): lane-aligned
    return weights, bias_packed


def dqn_reference(x, params_f32, *, emulate_bf16=False):
    """Pure-JAX reference. emulate_bf16=True mimics the kernel's bf16 casts."""
    h = x
    n = len(params_f32)
    for i, (w_t, b) in enumerate(params_f32):
        w = w_t
        if emulate_bf16:
            w = w.astype(jnp.bfloat16).astype(jnp.float32)
            h = h.astype(jnp.bfloat16).astype(jnp.float32)
        h = h @ w + b
        if i < n - 1:
            h = jnp.maximum(h, 0.0)
    return h


if __name__ == "__main__":
    B = 2
    N_OBS = 16
    N_ACTIONS = 4

    key = jax.random.PRNGKey(0)
    key, kx = jax.random.split(key)
    x = jax.random.normal(kx, (B, N_OBS), dtype=jnp.float32)

    params = init_dqn_params(key, N_OBS, N_ACTIONS)
    weights_bf16, bias_packed = prepare_params(params)

    out = dqn_forward(x, weights_bf16, bias_packed, n_actions=N_ACTIONS)
    out = jax.block_until_ready(out)
    assert out.shape == (B, N_ACTIONS), out.shape

    # Tight check vs. a reference that emulates the kernel's bf16 rounding.
    ref_bf16 = dqn_reference(x, params, emulate_bf16=True)
    err_bf16 = jnp.max(jnp.abs(out - ref_bf16))
    assert jnp.allclose(out, ref_bf16, atol=5e-3, rtol=5e-3), f"bf16-ref err {err_bf16}"

    # Loose check vs. the exact f32 module semantics (bf16 weight quantization noise).
    ref_f32 = dqn_reference(x, params)
    err_f32 = jnp.max(jnp.abs(out - ref_f32))
    assert jnp.allclose(out, ref_f32, atol=5e-2, rtol=5e-2), f"f32-ref err {err_f32}"

    print("KERNEL_OK")
</pallas_src>

<mosaic_0001>
module attributes {stable_mosaic.version = 11 : i64} {
  func.func @dqn_kernel(%arg0: i32, %arg1: memref<128x16xf32, #tpu.memory_space<vmem>>, %arg2: memref<16x512xbf16, #tpu.memory_space<vmem>>, %arg3: memref<512x512xbf16, #tpu.memory_space<vmem>>, %arg4: memref<512x256xbf16, #tpu.memory_space<vmem>>, %arg5: memref<256x256xbf16, #tpu.memory_space<vmem>>, %arg6: memref<256x128xbf16, #tpu.memory_space<vmem>>, %arg7: memref<128x128xbf16, #tpu.memory_space<vmem>>, %arg8: memref<1x1792xf32, #tpu.memory_space<vmem>>, %arg9: memref<128x128xf32, #tpu.memory_space<vmem>>) attributes {dimension_semantics = [#tpu.dimension_semantics<parallel>], iteration_bounds = array<i64: 1>, scalar_prefetch = 0 : i64, scratch_operands = 0 : i64, tpu.core_type = #tpu.core_type<tc>, window_params = [{transform_indices = @transform_0, window_bounds = array<i64: 128, 16>}, {pipeline_mode = #tpu.pipeline_mode<synchronous>, transform_indices = @transform_1, window_bounds = array<i64: 16, 512>}, {pipeline_mode = #tpu.pipeline_mode<synchronous>, transform_indices = @transform_2, window_bounds = array<i64: 512, 512>}, {pipeline_mode = #tpu.pipeline_mode<synchronous>, transform_indices = @transform_3, window_bounds = array<i64: 512, 256>}, {pipeline_mode = #tpu.pipeline_mode<synchronous>, transform_indices = @transform_4, window_bounds = array<i64: 256, 256>}, {pipeline_mode = #tpu.pipeline_mode<synchronous>, transform_indices = @transform_5, window_bounds = array<i64: 256, 128>}, {pipeline_mode = #tpu.pipeline_mode<synchronous>, transform_indices = @transform_6, window_bounds = array<i64: 128, 128>}, {pipeline_mode = #tpu.pipeline_mode<synchronous>, transform_indices = @transform_7, window_bounds = array<i64: 1, 1792>}, {transform_indices = @transform_8, window_bounds = array<i64: 128, 128>}]} {
    %c0 = arith.constant 0 : index
    %c0_0 = arith.constant 0 : index
    %0 = vector.load %arg1[%c0, %c0_0] : memref<128x16xf32, #tpu.memory_space<vmem>>, vector<128x16xf32>
    %c0_1 = arith.constant 0 : index
    %c0_2 = arith.constant 0 : index
    %1 = vector.load %arg8[%c0_1, %c0_2] : memref<1x1792xf32, #tpu.memory_space<vmem>>, vector<1x512xf32>
    %2 = arith.truncf %0 : vector<128x16xf32> to vector<128x16xbf16>
    %c0_3 = arith.constant 0 : index
    %c0_4 = arith.constant 0 : index
    %3 = vector.load %arg2[%c0_3, %c0_4] : memref<16x512xbf16, #tpu.memory_space<vmem>>, vector<16x512xbf16>
    %cst = arith.constant dense<0.000000e+00> : vector<128x512xf32>
    %4 = tpu.matmul %2, %3, %cst {dimension_numbers = #tpu.dot_dimension_numbers<[1], [0], [0], [1], [0, 0, 1, 1], [], []>} : vector<128x16xbf16>, vector<16x512xbf16>, vector<128x512xf32> -> vector<128x512xf32>
    %5 = vector.broadcast %1 : vector<1x512xf32> to vector<128x512xf32>
    %6 = arith.addf %4, %5 : vector<128x512xf32>
    %cst_5 = arith.constant 0.000000e+00 : f32
    %7 = vector.broadcast %cst_5 : f32 to vector<128x512xf32>
    %8 = arith.maximumf %6, %7 : vector<128x512xf32>
    %c0_6 = arith.constant 0 : index
    %c512 = arith.constant 512 : index
    %9 = vector.load %arg8[%c0_6, %c512] : memref<1x1792xf32, #tpu.memory_space<vmem>>, vector<1x512xf32>
    %10 = arith.truncf %8 : vector<128x512xf32> to vector<128x512xbf16>
    %c0_7 = arith.constant 0 : index
    %c0_8 = arith.constant 0 : index
    %11 = vector.load %arg3[%c0_7, %c0_8] : memref<512x512xbf16, #tpu.memory_space<vmem>>, vector<512x512xbf16>
    %cst_9 = arith.constant dense<0.000000e+00> : vector<128x512xf32>
    %12 = tpu.matmul %10, %11, %cst_9 {dimension_numbers = #tpu.dot_dimension_numbers<[1], [0], [0], [1], [0, 0, 1, 1], [], []>} : vector<128x512xbf16>, vector<512x512xbf16>, vector<128x512xf32> -> vector<128x512xf32>
    %13 = vector.broadcast %9 : vector<1x512xf32> to vector<128x512xf32>
    %14 = arith.addf %12, %13 : vector<128x512xf32>
    %cst_10 = arith.constant 0.000000e+00 : f32
    %15 = vector.broadcast %cst_10 : f32 to vector<128x512xf32>
    %16 = arith.maximumf %14, %15 : vector<128x512xf32>
    %c0_11 = arith.constant 0 : index
    %c1024 = arith.constant 1024 : index
    %17 = vector.load %arg8[%c0_11, %c1024] : memref<1x1792xf32, #tpu.memory_space<vmem>>, vector<1x256xf32>
    %18 = arith.truncf %16 : vector<128x512xf32> to vector<128x512xbf16>
    %c0_12 = arith.constant 0 : index
    %c0_13 = arith.constant 0 : index
    %19 = vector.load %arg4[%c0_12, %c0_13] : memref<512x256xbf16, #tpu.memory_space<vmem>>, vector<512x256xbf16>
    %cst_14 = arith.constant dense<0.000000e+00> : vector<128x256xf32>
    %20 = tpu.matmul %18, %19, %cst_14 {dimension_numbers = #tpu.dot_dimension_numbers<[1], [0], [0], [1], [0, 0, 1, 1], [], []>} : vector<128x512xbf16>, vector<512x256xbf16>, vector<128x256xf32> -> vector<128x256xf32>
    %21 = vector.broadcast %17 : vector<1x256xf32> to vector<128x256xf32>
    %22 = arith.addf %20, %21 : vector<128x256xf32>
    %cst_15 = arith.constant 0.000000e+00 : f32
    %23 = vector.broadcast %cst_15 : f32 to vector<128x256xf32>
    %24 = arith.maximumf %22, %23 : vector<128x256xf32>
    %c0_16 = arith.constant 0 : index
    %c1280 = arith.constant 1280 : index
    %25 = vector.load %arg8[%c0_16, %c1280] : memref<1x1792xf32, #tpu.memory_space<vmem>>, vector<1x256xf32>
    %26 = arith.truncf %24 : vector<128x256xf32> to vector<128x256xbf16>
    %c0_17 = arith.constant 0 : index
    %c0_18 = arith.constant 0 : index
    %27 = vector.load %arg5[%c0_17, %c0_18] : memref<256x256xbf16, #tpu.memory_space<vmem>>, vector<256x256xbf16>
    %cst_19 = arith.constant dense<0.000000e+00> : vector<128x256xf32>
    %28 = tpu.matmul %26, %27, %cst_19 {dimension_numbers = #tpu.dot_dimension_numbers<[1], [0], [0], [1], [0, 0, 1, 1], [], []>} : vector<128x256xbf16>, vector<256x256xbf16>, vector<128x256xf32> -> vector<128x256xf32>
    %29 = vector.broadcast %25 : vector<1x256xf32> to vector<128x256xf32>
    %30 = arith.addf %28, %29 : vector<128x256xf32>
    %cst_20 = arith.constant 0.000000e+00 : f32
    %31 = vector.broadcast %cst_20 : f32 to vector<128x256xf32>
    %32 = arith.maximumf %30, %31 : vector<128x256xf32>
    %c0_21 = arith.constant 0 : index
    %c1536 = arith.constant 1536 : index
    %33 = vector.load %arg8[%c0_21, %c1536] : memref<1x1792xf32, #tpu.memory_space<vmem>>, vector<1x128xf32>
    %34 = arith.truncf %32 : vector<128x256xf32> to vector<128x256xbf16>
    %c0_22 = arith.constant 0 : index
    %c0_23 = arith.constant 0 : index
    %35 = vector.load %arg6[%c0_22, %c0_23] : memref<256x128xbf16, #tpu.memory_space<vmem>>, vector<256x128xbf16>
    %cst_24 = arith.constant dense<0.000000e+00> : vector<128x128xf32>
    %36 = tpu.matmul %34, %35, %cst_24 {dimension_numbers = #tpu.dot_dimension_numbers<[1], [0], [0], [1], [0, 0, 1, 1], [], []>} : vector<128x256xbf16>, vector<256x128xbf16>, vector<128x128xf32> -> vector<128x128xf32>
    %37 = vector.broadcast %33 : vector<1x128xf32> to vector<128x128xf32>
    %38 = arith.addf %36, %37 : vector<128x128xf32>
    %cst_25 = arith.constant 0.000000e+00 : f32
    %39 = vector.broadcast %cst_25 : f32 to vector<128x128xf32>
    %40 = arith.maximumf %38, %39 : vector<128x128xf32>
    %c0_26 = arith.constant 0 : index
    %c1664 = arith.constant 1664 : index
    %41 = vector.load %arg8[%c0_26, %c1664] : memref<1x1792xf32, #tpu.memory_space<vmem>>, vector<1x128xf32>
    %42 = arith.truncf %40 : vector<128x128xf32> to vector<128x128xbf16>
    %c0_27 = arith.constant 0 : index
    %c0_28 = arith.constant 0 : index
    %43 = vector.load %arg7[%c0_27, %c0_28] : memref<128x128xbf16, #tpu.memory_space<vmem>>, vector<128x128xbf16>
    %cst_29 = arith.constant dense<0.000000e+00> : vector<128x128xf32>
    %44 = tpu.matmul %42, %43, %cst_29 {dimension_numbers = #tpu.dot_dimension_numbers<[1], [0], [0], [1], [0, 0, 1, 1], [], []>} : vector<128x128xbf16>, vector<128x128xbf16>, vector<128x128xf32> -> vector<128x128xf32>
    %45 = vector.broadcast %41 : vector<1x128xf32> to vector<128x128xf32>
    %46 = arith.addf %44, %45 : vector<128x128xf32>
    %c0_30 = arith.constant 0 : index
    %c0_31 = arith.constant 0 : index
    %47 = vector.load %arg9[%c0_30, %c0_31] : memref<128x128xf32, #tpu.memory_space<vmem>>, vector<128x128xf32>
    tpu.vector_store %arg9[%c0_30, %c0_31], %46 {strides = array<i32>} : memref<128x128xf32, #tpu.memory_space<vmem>>, vector<128x128xf32>,
    return
  }
  func.func @transform_0(%arg0: i32) -> (i32, i32) {
    %c0_i32 = arith.constant 0 : i32
    %c0_i32_0 = arith.constant 0 : i32
    return %arg0, %c0_i32 : i32, i32
  }
  func.func @transform_1(%arg0: i32) -> (i32, i32) {
    %c0_i32 = arith.constant 0 : i32
    %c0_i32_0 = arith.constant 0 : i32
    %c0_i32_1 = arith.constant 0 : i32
    return %c0_i32, %c0_i32_0 : i32, i32
  }
  func.func @transform_2(%arg0: i32) -> (i32, i32) {
    %c0_i32 = arith.constant 0 : i32
    %c0_i32_0 = arith.constant 0 : i32
    %c0_i32_1 = arith.constant 0 : i32
    return %c0_i32, %c0_i32_0 : i32, i32
  }
  func.func @transform_3(%arg0: i32) -> (i32, i32) {
    %c0_i32 = arith.constant 0 : i32
    %c0_i32_0 = arith.constant 0 : i32
    %c0_i32_1 = arith.constant 0 : i32
    return %c0_i32, %c0_i32_0 : i32, i32
  }
  func.func @transform_4(%arg0: i32) -> (i32, i32) {
    %c0_i32 = arith.constant 0 : i32
    %c0_i32_0 = arith.constant 0 : i32
    %c0_i32_1 = arith.constant 0 : i32
    return %c0_i32, %c0_i32_0 : i32, i32
  }
  func.func @transform_5(%arg0: i32) -> (i32, i32) {
    %c0_i32 = arith.constant 0 : i32
    %c0_i32_0 = arith.constant 0 : i32
    %c0_i32_1 = arith.constant 0 : i32
    return %c0_i32, %c0_i32_0 : i32, i32
  }
  func.func @transform_6(%arg0: i32) -> (i32, i32) {
    %c0_i32 = arith.constant 0 : i32
    %c0_i32_0 = arith.constant 0 : i32
    %c0_i32_1 = arith.constant 0 : i32
    return %c0_i32, %c0_i32_0 : i32, i32
  }
  func.func @transform_7(%arg0: i32) -> (i32, i32) {
    %c0_i32 = arith.constant 0 : i32
    %c0_i32_0 = arith.constant 0 : i32
    %c0_i32_1 = arith.constant 0 : i32
    return %c0_i32, %c0_i32_0 : i32, i32
  }
  func.func @transform_8(%arg0: i32) -> (i32, i32) {
    %c0_i32 = arith.constant 0 : i32
    %c0_i32_0 = arith.constant 0 : i32
    return %arg0, %c0_i32 : i32, i32
  }
}

</mosaic_0001>

<llo_original>
// kernel: dqn_forward.1
$region0: #{dqn_forward.1}
  #allocation0 [shape = 'u32[]', space=smem, size = 0x4, offset = 0x4, fixed_abs, tag = 'smem constant byte address 0x4 - core index']
  #allocation1 [shape = 'u32[144,128]{1,0:T(1,128)}', space=vmem, size = 0x12000, scoped, tag = 'internal scratch']
  %s0 = inlined_call_operand.vmem [shape: f32[128,16], index: 0, kind: input, shape index: {}]
  %s1 = inlined_call_operand.hbm [shape: bf16[16,512], index: 1, kind: input, shape index: {}]
  %s2 = inlined_call_operand.hbm [shape: bf16[512,512], index: 2, kind: input, shape index: {}]
  %s3 = inlined_call_operand.hbm [shape: bf16[512,256], index: 3, kind: input, shape index: {}]
  %s4 = inlined_call_operand.hbm [shape: bf16[256,256], index: 4, kind: input, shape index: {}]
  %s5 = inlined_call_operand.vmem [shape: bf16[256,128], index: 5, kind: input, shape index: {}]
  %s6 = inlined_call_operand.hbm [shape: bf16[128,128], index: 6, kind: input, shape index: {}]
  %s7 = inlined_call_operand.vmem [shape: f32[1,1792], index: 7, kind: input, shape index: {}]
  %s8 = inlined_call_operand.vmem [shape: f32[128,128], index: 8, kind: output, shape index: {}]
  %s9 = sld [smem:[#allocation0]]
  $region62: #{dqn_forward.1} parent=0
    _
  %s11 = ssub.s32 1, %s9
  %s12 = scalar_select 0, %s11, %s9
  $region1: #{dqn_forward.1} parent=0
    #allocation2 [shape = 'u8[16384]{0}', space=vmem, size = 0x4000, scoped, tag = 'input window, operand 1, single buffered']
    #allocation3 [shape = 's32[1]{0}', space=sflag, size = 0x4, scoped, tag = 'scoped memory for dqn_forward.1']
    #allocation4 [shape = 'u8[524288]{0}', space=vmem, size = 0x80000, scoped, tag = 'input window, operand 2, single buffered']
    #allocation5 [shape = 's32[1]{0}', space=sflag, size = 0x4, scoped, tag = 'scoped memory for dqn_forward.1']
    #allocation6 [shape = 'u8[262144]{0}', space=vmem, size = 0x40000, scoped, tag = 'input window, operand 3, single buffered']
    #allocation7 [shape = 'u8[131072]{0}', space=vmem, size = 0x20000, scoped, tag = 'input window, operand 4, single buffered']
    #allocation8 [shape = 's32[1]{0}', space=sflag, size = 0x4, scoped, tag = 'scoped memory for dqn_forward.1']
    #allocation9 [shape = 'u8[32768]{0}', space=vmem, size = 0x8000, scoped, tag = 'input window, operand 6, single buffered']
    %13 = vsyncpa [#allocation3], 0
    %14 = vsyncpa [#allocation5], 0
    %15 = vsyncpa [#allocation8], 0
    // Predicated region
    $region2: #{dqn_forward.1} parent=1 // pred_check
      _
    $region3: #{dqn_forward.1} parent=1 // pred_check_branch
      %17 = sbr.rel (0) target = $region5
    $region4: #{dqn_forward.1} parent=1 // pred_region
      _
    $region5: #{dqn_forward.1} parent=1 // pred_fallthru
      _
    // Predicated region
    $region6: #{dqn_forward.1} parent=1 // pred_check
      _
    $region7: #{dqn_forward.1} parent=1 // pred_check_branch
      %19 = sbr.rel (0) target = $region9
    $region8: #{dqn_forward.1} parent=1 // pred_region
      %s21 = ssub.s32 512, 512
      %22 = vsyncadd [#allocation3], %s21
      %s23 = sshll.u32 [#allocation2], 4
      %s24 = int_to_ptr.vmem [resolvable:$true] %s23
      %29 = dma.hbm_to_vmem [thread:$0]  %s1, 512, %s24, [#allocation3], 256, 256, 16
    $region9: #{dqn_forward.1} parent=1 // pred_fallthru
      _
    // Predicated region
    $region10: #{dqn_forward.1} parent=1 // pred_check
      _
    $region11: #{dqn_forward.1} parent=1 // pred_check_branch
      %31 = sbr.rel (0) target = $region13
    $region12: #{dqn_forward.1} parent=1 // pred_region
      %s33 = ssub.s32 16384, 16384
      %34 = vsyncadd [#allocation5], %s33
      %s35 = sshll.u32 [#allocation4], 4
      %s36 = int_to_ptr.vmem [resolvable:$true] %s35
      %41 = dma.hbm_to_vmem [thread:$0]  %s2, 16384, %s36, [#allocation5], 256, 256, 16
    $region13: #{dqn_forward.1} parent=1 // pred_fallthru
      _
    // Predicated region
    $region14: #{dqn_forward.1} parent=1 // pred_check
      _
    $region15: #{dqn_forward.1} parent=1 // pred_check_branch
      %43 = sbr.rel (0) target = $region17
    $region16: #{dqn_forward.1} parent=1 // pred_region
      %s45 = ssub.s32 8192, 8192
      %46 = vsyncadd [#allocation5], %s45
      %s47 = sshll.u32 [#allocation6], 4
      %s48 = int_to_ptr.vmem [resolvable:$true] %s47
      %53 = dma.hbm_to_vmem [thread:$0]  %s3, 8192, %s48, [#allocation5], 128, 128, 8
    $region17: #{dqn_forward.1} parent=1 // pred_fallthru
      _
    // Predicated region
    $region18: #{dqn_forward.1} parent=1 // pred_check
      _
    $region19: #{dqn_forward.1} parent=1 // pred_check_branch
      %55 = sbr.rel (0) target = $region21
    $region20: #{dqn_forward.1} parent=1 // pred_region
      %s57 = ssub.s32 4096, 4096
      %58 = vsyncadd [#allocation8], %s57
      %s59 = sshll.u32 [#allocation7], 4
      %s60 = int_to_ptr.vmem [resolvable:$true] %s59
      %65 = dma.hbm_to_vmem [thread:$0]  %s4, 4096, %s60, [#allocation8], 128, 128, 8
    $region21: #{dqn_forward.1} parent=1 // pred_fallthru
      _
    // Predicated region
    $region22: #{dqn_forward.1} parent=1 // pred_check
      _
    $region23: #{dqn_forward.1} parent=1 // pred_check_branch
      %67 = sbr.rel (0) target = $region25
    $region24: #{dqn_forward.1} parent=1 // pred_region
      _
    $region25: #{dqn_forward.1} parent=1 // pred_fallthru
      _
    // Predicated region
    $region26: #{dqn_forward.1} parent=1 // pred_check
      _
    $region27: #{dqn_forward.1} parent=1 // pred_check_branch
      %69 = sbr.rel (0) target = $region29
    $region28: #{dqn_forward.1} parent=1 // pred_region
      %s71 = ssub.s32 1024, 1024
      %72 = vsyncadd [#allocation8], %s71
      %s73 = sshll.u32 [#allocation9], 4
      %s74 = int_to_ptr.vmem [resolvable:$true] %s73
      %79 = dma.hbm_to_vmem [thread:$0]  %s6, 1024, %s74, [#allocation8], 64, 64, 4
    $region29: #{dqn_forward.1} parent=1 // pred_fallthru
      _
    // Predicated region
    $region30: #{dqn_forward.1} parent=1 // pred_check
      _
    $region31: #{dqn_forward.1} parent=1 // pred_check_branch
      %81 = sbr.rel (0) target = $region33
    $region32: #{dqn_forward.1} parent=1 // pred_region
      _
    $region33: #{dqn_forward.1} parent=1 // pred_fallthru
      _
    // Predicated region
    $region34: #{dqn_forward.1} parent=1 // pred_check
      _
    $region35: #{dqn_forward.1} parent=1 // pred_check_branch
      %83 = sbr.rel (0) target = $region37
    $region36: #{dqn_forward.1} parent=1 // pred_region
      %84 = dma.done [#allocation3], 512
    $region37: #{dqn_forward.1} parent=1 // pred_fallthru
      _
    // Predicated region
    $region38: #{dqn_forward.1} parent=1 // pred_check
      _
    $region39: #{dqn_forward.1} parent=1 // pred_check_branch
      %86 = sbr.rel (0) target = $region41
    $region40: #{dqn_forward.1} parent=1 // pred_region
      %87 = dma.done [#allocation5], 16384
    $region41: #{dqn_forward.1} parent=1 // pred_fallthru
      _
    // Predicated region
    $region42: #{dqn_forward.1} parent=1 // pred_check
      _
    $region43: #{dqn_forward.1} parent=1 // pred_check_branch
      %89 = sbr.rel (0) target = $region45
    $region44: #{dqn_forward.1} parent=1 // pred_region
      %90 = dma.done [#allocation5], 8192
    $region45: #{dqn_forward.1} parent=1 // pred_fallthru
      _
    // Predicated region
    $region46: #{dqn_forward.1} parent=1 // pred_check
      _
    $region47: #{dqn_forward.1} parent=1 // pred_check_branch
      %92 = sbr.rel (0) target = $region49
    $region48: #{dqn_forward.1} parent=1 // pred_region
      %93 = dma.done [#allocation8], 4096
    $region49: #{dqn_forward.1} parent=1 // pred_fallthru
      _
    // Predicated region
    $region50: #{dqn_forward.1} parent=1 // pred_check
      _
    $region51: #{dqn_forward.1} parent=1 // pred_check_branch
      %95 = sbr.rel (0) target = $region53
    $region52: #{dqn_forward.1} parent=1 // pred_region
      %96 = dma.done [#allocation8], 1024
    $region53: #{dqn_forward.1} parent=1 // pred_fallthru
      _
    %v98 = vld [vmem:[%s0] sm:$0xff]
    %v99 = vld [vmem:[%s0 + $0x8] sm:$0xff]
    %v100 = vld [vmem:[%s0 + $0x10] sm:$0xff]
    %v101 = vld [vmem:[%s0 + $0x18] sm:$0xff]
    %v102 = vld [vmem:[%s0 + $0x20] sm:$0xff]
    %v103 = vld [vmem:[%s0 + $0x28] sm:$0xff]
    %v104 = vld [vmem:[%s0 + $0x30] sm:$0xff]
    %v105 = vld [vmem:[%s0 + $0x38] sm:$0xff]
    %v106 = vld [vmem:[%s0 + $0x40] sm:$0xff]
    %v107 = vld [vmem:[%s0 + $0x48] sm:$0xff]
    %v108 = vld [vmem:[%s0 + $0x50] sm:$0xff]
    %v109 = vld [vmem:[%s0 + $0x58] sm:$0xff]
    %v110 = vld [vmem:[%s0 + $0x60] sm:$0xff]
    %v111 = vld [vmem:[%s0 + $0x68] sm:$0xff]
    %v112 = vld [vmem:[%s0 + $0x70] sm:$0xff]
    %v113 = vld [vmem:[%s0 + $0x78] sm:$0xff]
    %v114 = vld [vmem:[%s7] sm:$0xf]
    %v115 = vpack.c.bf16 %v99, %v98
    %v116 = vpack.c.bf16 %v101, %v100
    %v117 = vpack.c.bf16 %v103, %v102
    %v118 = vpack.c.bf16 %v105, %v104
    %v119 = vpack.c.bf16 %v107, %v106
    %v120 = vpack.c.bf16 %v109, %v108
    %v121 = vpack.c.bf16 %v111, %v110
    %v122 = vpack.c.bf16 %v113, %v112
    %v123 = vld [vmem:[#allocation2] sm:$0xff]
    %v124 = vld [vmem:[#allocation2 + $0x8] sm:$0xff]
    %v125 = vld [vmem:[#allocation2 + $0x10] sm:$0xff]
    %v126 = vld [vmem:[#allocation2 + $0x18] sm:$0xff]
    %v128 = vlaneseq
    %v129 = vshrl.u32 %v128, 7
    %v130 = vsub.s32 0, %v129
    %v131 = vrot.slane %v114, %v130
    %v132 = vlaneseq
    %v133 = vshrl.u32 %v132, 7
    %v134 = vsub.s32 1, %v133
    %v135 = vrot.slane %v114, %v134
    %v136 = vlaneseq
    %v137 = vshrl.u32 %v136, 7
    %v138 = vsub.s32 2, %v137
    %v139 = vrot.slane %v114, %v138
    %v140 = vlaneseq
    %v141 = vshrl.u32 %v140, 7
    %v142 = vsub.s32 3, %v141
    %v143 = vrot.slane %v114, %v142
    %v152 = vunpack.c.l.b16 %v123
    %v153 = vunpack.c.h.b16 %v123
    %v154 = vunpack.c.l.b16 %v124
    %v155 = vunpack.c.h.b16 %v124
    %v156 = vunpack.c.l.b16 %v125
    %v157 = vunpack.c.h.b16 %v125
    %v158 = vunpack.c.l.b16 %v126
    %v159 = vunpack.c.h.b16 %v126
    %v160 = vpack.c.b16 %v156, %v152
    %v161 = vpack.c.b16 %v157, %v153
    %v162 = vpack.c.b16 %v158, %v154
    %v163 = vpack.c.b16 %v159, %v155
    %vm168 = vcmask 130048
    %v170 = vsel %vm168, %v115, 0
    %v173 = vsel %vm168, %v116, 0
    %v176 = vsel %vm168, %v117, 0
    %v179 = vsel %vm168, %v118, 0
    %v182 = vsel %vm168, %v119, 0
    %v185 = vsel %vm168, %v120, 0
    %v188 = vsel %vm168, %v121, 0
    %v191 = vsel %vm168, %v122, 0
    %193 = vmatprep.subr.bf16.mxu0 %v161
    %194 = vmatpush1.bf16.msra.mxu0 %v160
    %195 = vmatprep.subr.bf16.mxu0 0
    %196 = vmatpush1.bf16.msra.mxu0 0
    %197 = vmatprep.subr.bf16.mxu0 0
    %198 = vmatpush1.bf16.msra.mxu0 0
    %199 = vmatprep.subr.bf16.mxu0 0
    %200 = vmatpush1.bf16.msra.mxu0 0
    %201 = vmatprep.subr.bf16.mxu0 0
    %202 = vmatpush1.bf16.msra.mxu0 0
    %203 = vmatprep.subr.bf16.mxu0 0
    %204 = vmatpush1.bf16.msra.mxu0 0
    %205 = vmatprep.subr.bf16.mxu0 0
    %206 = vmatpush1.bf16.msra.mxu0 0
    %207 = vmatprep.subr.bf16.mxu0 0
    %208 = vmatpush1.bf16.msra.mxu0 0
    %209 = vmatprep.subr.bf16.mxu0 0
    %210 = vmatpush1.bf16.msra.mxu0 0
    %211 = vmatprep.subr.bf16.mxu0 0
    %212 = vmatpush1.bf16.msra.mxu0 0
    %213 = vmatprep.subr.bf16.mxu0 0
    %214 = vmatpush1.bf16.msra.mxu0 0
    %215 = vmatprep.subr.bf16.mxu0 0
    %216 = vmatpush1.bf16.msra.mxu0 0
    %217 = vmatprep.subr.bf16.mxu0 0
    %218 = vmatpush1.bf16.msra.mxu0 0
    %219 = vmatprep.subr.bf16.mxu0 0
    %220 = vmatpush1.bf16.msra.mxu0 0
    %221 = vmatprep.subr.bf16.mxu0 0
    %222 = vmatpush1.bf16.msra.mxu0 0
    %223 = vmatprep.subr.bf16.mxu0 0
    %224 = vmatpush1.bf16.msra.mxu0 0
    %225 = vmatprep.mubr.bf16.mxu0 0
    %226 = vmatmul.mubr.bf16.gmra.mrb[0].mxu0 %v170
    %v227 = vpop.f32.mrb[0].mxu0
    %v228 = vadd.f32 %v131, %v227
    %v229 = vpop.f32.mrb[0].mxu0
    %v230 = vadd.f32 %v135, %v229
    %v231 = vpop.f32.mrb[0].mxu0
    %v232 = vadd.f32 %v131, %v231
    %v233 = vpop.f32.mrb[0].mxu0
    %v234 = vadd.f32 %v135, %v233
    %235 = vmatprep.mubr.bf16.mxu0 0
    %236 = vmatmul.mubr.bf16.gmra.mrb[0].mxu0 %v173
    %v237 = vpop.f32.mrb[0].mxu0
    %v238 = vadd.f32 %v131, %v237
    %v239 = vpop.f32.mrb[0].mxu0
    %v240 = vadd.f32 %v135, %v239
    %v241 = vpop.f32.mrb[0].mxu0
    %v242 = vadd.f32 %v131, %v241
    %v243 = vpop.f32.mrb[0].mxu0
    %v244 = vadd.f32 %v135, %v243
    %245 = vmatprep.mubr.bf16.mxu0 0
    %246 = vmatmul.mubr.bf16.gmra.mrb[0].mxu0 %v176
    %v247 = vpop.f32.mrb[0].mxu0
    %v248 = vadd.f32 %v131, %v247
    %v249 = vpop.f32.mrb[0].mxu0
    %v250 = vadd.f32 %v135, %v249
    %v251 = vpop.f32.mrb[0].mxu0
    %v252 = vadd.f32 %v131, %v251
    %v253 = vpop.f32.mrb[0].mxu0
    %v254 = vadd.f32 %v135, %v253
    %255 = vmatprep.mubr.bf16.mxu0 0
    %256 = vmatmul.mubr.bf16.gmra.mrb[0].mxu0 %v179
    %v257 = vpop.f32.mrb[0].mxu0
    %v258 = vadd.f32 %v131, %v257
    %v259 = vpop.f32.mrb[0].mxu0
    %v260 = vadd.f32 %v135, %v259
    %v261 = vpop.f32.mrb[0].mxu0
    %v262 = vadd.f32 %v131, %v261
    %v263 = vpop.f32.mrb[0].mxu0
    %v264 = vadd.f32 %v135, %v263
    %265 = vmatprep.mubr.bf16.mxu0 0
    %266 = vmatmul.mubr.bf16.gmra.mrb[0].mxu0 %v182
    %v267 = vpop.f32.mrb[0].mxu0
    %v268 = vadd.f32 %v131, %v267
    %v269 = vpop.f32.mrb[0].mxu0
    %v270 = vadd.f32 %v135, %v269
    %v271 = vpop.f32.mrb[0].mxu0
    %v272 = vadd.f32 %v131, %v271
    %v273 = vpop.f32.mrb[0].mxu0
    %v274 = vadd.f32 %v135, %v273
    %275 = vmatprep.mubr.bf16.mxu0 0
    %276 = vmatmul.mubr.bf16.gmra.mrb[0].mxu0 %v185
    %v277 = vpop.f32.mrb[0].mxu0
    %v278 = vadd.f32 %v131, %v277
    %v279 = vpop.f32.mrb[0].mxu0
    %v280 = vadd.f32 %v135, %v279
    %v281 = vpop.f32.mrb[0].mxu0
    %v282 = vadd.f32 %v131, %v281
    %v283 = vpop.f32.mrb[0].mxu0
    %v284 = vadd.f32 %v135, %v283
    %285 = vmatprep.mubr.bf16.mxu0 0
    %286 = vmatmul.mubr.bf16.gmra.mrb[0].mxu0 %v188
    %v287 = vpop.f32.mrb[0].mxu0
    %v288 = vadd.f32 %v131, %v287
    %v289 = vpop.f32.mrb[0].mxu0
    %v290 = vadd.f32 %v135, %v289
    %v291 = vpop.f32.mrb[0].mxu0
    %v292 = vadd.f32 %v131, %v291
    %v293 = vpop.f32.mrb[0].mxu0
    %v294 = vadd.f32 %v135, %v293
    %295 = vmatprep.mubr.bf16.mxu0 0
    %296 = vmatmul.mubr.bf16.gmra.mrb[0].mxu0 %v191
    %v297 = vpop.f32.mrb[0].mxu0
    %v298 = vadd.f32 %v131, %v297
    %v299 = vpop.f32.mrb[0].mxu0
    %v300 = vadd.f32 %v135, %v299
    %v301 = vpop.f32.mrb[0].mxu0
    %v302 = vadd.f32 %v131, %v301
    %v303 = vpop.f32.mrb[0].mxu0
    %v304 = vadd.f32 %v135, %v303
    %305 = vdwg.mxu0
    %306 = vmatprep.subr.bf16.mxu0 %v163
    %307 = vmatpush1.bf16.msra.mxu0 %v162
    %308 = vmatprep.subr.bf16.mxu0 0
    %309 = vmatpush1.bf16.msra.mxu0 0
    %310 = vmatprep.subr.bf16.mxu0 0
    %311 = vmatpush1.bf16.msra.mxu0 0
    %312 = vmatprep.subr.bf16.mxu0 0
    %313 = vmatpush1.bf16.msra.mxu0 0
    %314 = vmatprep.subr.bf16.mxu0 0
    %315 = vmatpush1.bf16.msra.mxu0 0
    %316 = vmatprep.subr.bf16.mxu0 0
    %317 = vmatpush1.bf16.msra.mxu0 0
    %318 = vmatprep.subr.bf16.mxu0 0
    %319 = vmatpush1.bf16.msra.mxu0 0
    %320 = vmatprep.subr.bf16.mxu0 0
    %321 = vmatpush1.bf16.msra.mxu0 0
    %322 = vmatprep.subr.bf16.mxu0 0
    %323 = vmatpush1.bf16.msra.mxu0 0
    %324 = vmatprep.subr.bf16.mxu0 0
    %325 = vmatpush1.bf16.msra.mxu0 0
    %326 = vmatprep.subr.bf16.mxu0 0
    %327 = vmatpush1.bf16.msra.mxu0 0
    %328 = vmatprep.subr.bf16.mxu0 0
    %329 = vmatpush1.bf16.msra.mxu0 0
    %330 = vmatprep.subr.bf16.mxu0 0
    %331 = vmatpush1.bf16.msra.mxu0 0
    %332 = vmatprep.subr.bf16.mxu0 0
    %333 = vmatpush1.bf16.msra.mxu0 0
    %334 = vmatprep.subr.bf16.mxu0 0
    %335 = vmatpush1.bf16.msra.mxu0 0
    %336 = vmatprep.subr.bf16.mxu0 0
    %337 = vmatpush1.bf16.msra.mxu0 0
    %338 = vmatprep.mubr.bf16.mxu0 0
    %339 = vmatmul.mubr.bf16.gmra.mrb[0].mxu0 %v170
    %v340 = vpop.f32.mrb[0].mxu0
    %v341 = vadd.f32 %v139, %v340
    %v342 = vpop.f32.mrb[0].mxu0
    %v343 = vadd.f32 %v143, %v342
    %v344 = vpop.f32.mrb[0].mxu0
    %v345 = vadd.f32 %v139, %v344
    %v346 = vpop.f32.mrb[0].mxu0
    %v347 = vadd.f32 %v143, %v346
    %348 = vmatprep.mubr.bf16.mxu0 0
    %349 = vmatmul.mubr.bf16.gmra.mrb[0].mxu0 %v173
    %v350 = vpop.f32.mrb[0].mxu0
    %v351 = vadd.f32 %v139, %v350
    %v352 = vpop.f32.mrb[0].mxu0
    %v353 = vadd.f32 %v143, %v352
    %v354 = vpop.f32.mrb[0].mxu0
    %v355 = vadd.f32 %v139, %v354
    %v356 = vpop.f32.mrb[0].mxu0
    %v357 = vadd.f32 %v143, %v356
    %358 = vmatprep.mubr.bf16.mxu0 0
    %359 = vmatmul.mubr.bf16.gmra.mrb[0].mxu0 %v176
    %v360 = vpop.f32.mrb[0].mxu0
    %v361 = vadd.f32 %v139, %v360
    %v362 = vpop.f32.mrb[0].mxu0
    %v363 = vadd.f32 %v143, %v362
    %v364 = vpop.f32.mrb[0].mxu0
    %v365 = vadd.f32 %v139, %v364
    %v366 = vpop.f32.mrb[0].mxu0
    %v367 = vadd.f32 %v143, %v366
    %368 = vmatprep.mubr.bf16.mxu0 0
    %369 = vmatmul.mubr.bf16.gmra.mrb[0].mxu0 %v179
    %v370 = vpop.f32.mrb[0].mxu0
    %v371 = vadd.f32 %v139, %v370
    %v372 = vpop.f32.mrb[0].mxu0
    %v373 = vadd.f32 %v143, %v372
    %v374 = vpop.f32.mrb[0].mxu0
    %v375 = vadd.f32 %v139, %v374
    %v376 = vpop.f32.mrb[0].mxu0
    %v377 = vadd.f32 %v143, %v376
    %378 = vmatprep.mubr.bf16.mxu0 0
    %379 = vmatmul.mubr.bf16.gmra.mrb[0].mxu0 %v182
    %v380 = vpop.f32.mrb[0].mxu0
    %v381 = vadd.f32 %v139, %v380
    %v382 = vpop.f32.mrb[0].mxu0
    %v383 = vadd.f32 %v143, %v382
    %v384 = vpop.f32.mrb[0].mxu0
    %v385 = vadd.f32 %v139, %v384
    %v386 = vpop.f32.mrb[0].mxu0
    %v387 = vadd.f32 %v143, %v386
    %388 = vmatprep.mubr.bf16.mxu0 0
    %389 = vmatmul.mubr.bf16.gmra.mrb[0].mxu0 %v185
    %v390 = vpop.f32.mrb[0].mxu0
    %v391 = vadd.f32 %v139, %v390
    %v392 = vpop.f32.mrb[0].mxu0
    %v393 = vadd.f32 %v143, %v392
    %v394 = vpop.f32.mrb[0].mxu0
    %v395 = vadd.f32 %v139, %v394
    %v396 = vpop.f32.mrb[0].mxu0
    %v397 = vadd.f32 %v143, %v396
    %398 = vmatprep.mubr.bf16.mxu0 0
    %399 = vmatmul.mubr.bf16.gmra.mrb[0].mxu0 %v188
    %v400 = vpop.f32.mrb[0].mxu0
    %v401 = vadd.f32 %v139, %v400
    %v402 = vpop.f32.mrb[0].mxu0
    %v403 = vadd.f32 %v143, %v402
    %v404 = vpop.f32.mrb[0].mxu0
    %v405 = vadd.f32 %v139, %v404
    %v406 = vpop.f32.mrb[0].mxu0
    %v407 = vadd.f32 %v143, %v406
    %408 = vmatprep.mubr.bf16.mxu0 0
    %409 = vmatmul.mubr.bf16.gmra.mrb[0].mxu0 %v191
    %v410 = vpop.f32.mrb[0].mxu0
    %v411 = vadd.f32 %v139, %v410
    %v412 = vpop.f32.mrb[0].mxu0
    %v413 = vadd.f32 %v143, %v412
    %v414 = vpop.f32.mrb[0].mxu0
    %v415 = vadd.f32 %v139, %v414
    %v416 = vpop.f32.mrb[0].mxu0
    %v417 = vadd.f32 %v143, %v416
    %418 = vdwg.mxu0
    %v419 = vmax.f32 %v228, 0.0
    %v420 = vmax.f32 %v230, 0.0
    %v421 = vmax.f32 %v341, 0.0
    %v422 = vmax.f32 %v343, 0.0
    %v423 = vmax.f32 %v232, 0.0
    %v424 = vmax.f32 %v234, 0.0
    %v425 = vmax.f32 %v345, 0.0
    %v426 = vmax.f32 %v347, 0.0
    %v427 = vmax.f32 %v238, 0.0
    %v428 = vmax.f32 %v240, 0.0
    %v429 = vmax.f32 %v351, 0.0
    %v430 = vmax.f32 %v353, 0.0
    %v431 = vmax.f32 %v242, 0.0
    %v432 = vmax.f32 %v244, 0.0
    %v433 = vmax.f32 %v355, 0.0
    %v434 = vmax.f32 %v357, 0.0
    %v435 = vmax.f32 %v248, 0.0
    %v436 = vmax.f32 %v250, 0.0
    %v437 = vmax.f32 %v361, 0.0
    %v438 = vmax.f32 %v363, 0.0
    %v439 = vmax.f32 %v252, 0.0
    %v440 = vmax.f32 %v254, 0.0
    %v441 = vmax.f32 %v365, 0.0
    %v442 = vmax.f32 %v367, 0.0
    %v443 = vmax.f32 %v258, 0.0
    %v444 = vmax.f32 %v260, 0.0
    %v445 = vmax.f32 %v371, 0.0
    %v446 = vmax.f32 %v373, 0.0
    %v447 = vmax.f32 %v262, 0.0
    %v448 = vmax.f32 %v264, 0.0
    %v449 = vmax.f32 %v375, 0.0
    %v450 = vmax.f32 %v377, 0.0
    %v451 = vmax.f32 %v268, 0.0
    %v452 = vmax.f32 %v270, 0.0
    %v453 = vmax.f32 %v381, 0.0
    %v454 = vmax.f32 %v383, 0.0
    %v455 = vmax.f32 %v272, 0.0
    %v456 = vmax.f32 %v274, 0.0
    %v457 = vmax.f32 %v385, 0.0
    %v458 = vmax.f32 %v387, 0.0
    %v459 = vmax.f32 %v278, 0.0
    %v460 = vmax.f32 %v280, 0.0
    %v461 = vmax.f32 %v391, 0.0
    %v462 = vmax.f32 %v393, 0.0
    %v463 = vmax.f32 %v282, 0.0
    %v464 = vmax.f32 %v284, 0.0
    %v465 = vmax.f32 %v395, 0.0
    %v466 = vmax.f32 %v397, 0.0
    %v467 = vmax.f32 %v288, 0.0
    %v468 = vmax.f32 %v290, 0.0
    %v469 = vmax.f32 %v401, 0.0
    %v470 = vmax.f32 %v403, 0.0
    %v471 = vmax.f32 %v292, 0.0
    %v472 = vmax.f32 %v294, 0.0
    %v473 = vmax.f32 %v405, 0.0
    %v474 = vmax.f32 %v407, 0.0
    %v475 = vmax.f32 %v298, 0.0
    %v476 = vmax.f32 %v300, 0.0
    %v477 = vmax.f32 %v411, 0.0
    %v478 = vmax.f32 %v413, 0.0
    %v479 = vmax.f32 %v302, 0.0
    %v480 = vmax.f32 %v304, 0.0
    %v481 = vmax.f32 %v415, 0.0
    %v482 = vmax.f32 %v417, 0.0
    %v483 = vld [vmem:[%s7 + $0x4] sm:$0xf]
    %v484 = vpack.c.bf16 %v423, %v419
    %v485 = vpack.c.bf16 %v424, %v420
    %v486 = vpack.c.bf16 %v425, %v421
    %v487 = vpack.c.bf16 %v426, %v422
    %v488 = vpack.c.bf16 %v431, %v427
    %v489 = vpack.c.bf16 %v432, %v428
    %v490 = vpack.c.bf16 %v433, %v429
    %v491 = vpack.c.bf16 %v434, %v430
    %v492 = vpack.c.bf16 %v439, %v435
    %v493 = vpack.c.bf16 %v440, %v436
    %v494 = vpack.c.bf16 %v441, %v437
    %v495 = vpack.c.bf16 %v442, %v438
    %v496 = vpack.c.bf16 %v447, %v443
    %v497 = vpack.c.bf16 %v448, %v444
    %v498 = vpack.c.bf16 %v449, %v445
    %v499 = vpack.c.bf16 %v450, %v446
    %v500 = vpack.c.bf16 %v455, %v451
    %v501 = vpack.c.bf16 %v456, %v452
    %v502 = vpack.c.bf16 %v457, %v453
    %v503 = vpack.c.bf16 %v458, %v454
    %v504 = vpack.c.bf16 %v463, %v459
    %v505 = vpack.c.bf16 %v464, %v460
    %v506 = vpack.c.bf16 %v465, %v461
    %v507 = vpack.c.bf16 %v466, %v462
    %v508 = vpack.c.bf16 %v471, %v467
    %v509 = vpack.c.bf16 %v472, %v468
    %v510 = vpack.c.bf16 %v473, %v469
    %v511 = vpack.c.bf16 %v474, %v470
    %v512 = vpack.c.bf16 %v479, %v475
    %v513 = vpack.c.bf16 %v480, %v476
    %v514 = vpack.c.bf16 %v481, %v477
    %v515 = vpack.c.bf16 %v482, %v478
    %v516 = vld [vmem:[#allocation4] sm:$0xff]
    %v517 = vld [vmem:[#allocation4 + $0x8] sm:$0xff]
    %v518 = vld [vmem:[#allocation4 + $0x10] sm:$0xff]
    %v519 = vld [vmem:[#allocation4 + $0x18] sm:$0xff]
    %v520 = vld [vmem:[#allocation4 + $0x20] sm:$0xff]
    %v521 = vld [vmem:[#allocation4 + $0x28] sm:$0xff]
    %v522 = vld [vmem:[#allocation4 + $0x30] sm:$0xff]
    %v523 = vld [vmem:[#allocation4 + $0x38] sm:$0xff]
    %v524 = vld [vmem:[#allocation4 + $0x40] sm:$0xff]
    %v525 = vld [vmem:[#allocation4 + $0x48] sm:$0xff]
    %v526 = vld [vmem:[#allocation4 + $0x50] sm:$0xff]
    %v527 = vld [vmem:[#allocation4 + $0x58] sm:$0xff]
    %v528 = vld [vmem:[#allocation4 + $0x60] sm:$0xff]
    %v529 = vld [vmem:[#allocation4 + $0x68] sm:$0xff]
    %v530 = vld [vmem:[#allocation4 + $0x70] sm:$0xff]
    %v531 = vld [vmem:[#allocation4 + $0x78] sm:$0xff]
    %v532 = vld [vmem:[#allocation4 + $0x80] sm:$0xff]
    %v533 = vld [vmem:[#allocation4 + $0x88] sm:$0xff]
    %v534 = vld [vmem:[#allocation4 + $0x90] sm:$0xff]
    %v535 = vld [vmem:[#allocation4 + $0x98] sm:$0xff]
    %v536 = vld [vmem:[#allocation4 + $0xa0] sm:$0xff]
    %v537 = vld [vmem:[#allocation4 + $0xa8] sm:$0xff]
    %v538 = vld [vmem:[#allocation4 + $0xb0] sm:$0xff]
    %v539 = vld [vmem:[#allocation4 + $0xb8] sm:$0xff]
    %v540 = vld [vmem:[#allocation4 + $0xc0] sm:$0xff]
    %v541 = vld [vmem:[#allocation4 + $0xc8] sm:$0xff]
    %v542 = vld [vmem:[#allocation4 + $0xd0] sm:$0xff]
    %v543 = vld [vmem:[#allocation4 + $0xd8] sm:$0xff]
    %v544 = vld [vmem:[#allocation4 + $0xe0] sm:$0xff]
    %v545 = vld [vmem:[#allocation4 + $0xe8] sm:$0xff]
    %v546 = vld [vmem:[#allocation4 + $0xf0] sm:$0xff]
    %v547 = vld [vmem:[#allocation4 + $0xf8] sm:$0xff]
    %v548 = vld [vmem:[#allocation4 + $0x100] sm:$0xff]
    %v549 = vld [vmem:[#allocation4 + $0x108] sm:$0xff]
    %v550 = vld [vmem:[#allocation4 + $0x110] sm:$0xff]
    %v551 = vld [vmem:[#allocation4 + $0x118] sm:$0xff]
    %v552 = vld [vmem:[#allocation4 + $0x120] sm:$0xff]
    %v553 = vld [vmem:[#allocation4 + $0x128] sm:$0xff]
    %v554 = vld [vmem:[#allocation4 + $0x130] sm:$0xff]
    %v555 = vld [vmem:[#allocation4 + $0x138] sm:$0xff]
    %v556 = vld [vmem:[#allocation4 + $0x140] sm:$0xff]
    %v557 = vld [vmem:[#allocation4 + $0x148] sm:$0xff]
    %v558 = vld [vmem:[#allocation4 + $0x150] sm:$0xff]
    %v559 = vld [vmem:[#allocation4 + $0x158] sm:$0xff]
    %v560 = vld [vmem:[#allocation4 + $0x160] sm:$0xff]
    %v561 = vld [vmem:[#allocation4 + $0x168] sm:$0xff]
    %v562 = vld [vmem:[#allocation4 + $0x170] sm:$0xff]
    %v563 = vld [vmem:[#allocation4 + $0x178] sm:$0xff]
    %v564 = vld [vmem:[#allocation4 + $0x180] sm:$0xff]
    %v565 = vld [vmem:[#allocation4 + $0x188] sm:$0xff]
    %v566 = vld [vmem:[#allocation4 + $0x190] sm:$0xff]
    %v567 = vld [vmem:[#allocation4 + $0x198] sm:$0xff]
    %v568 = vld [vmem:[#allocation4 + $0x1a0] sm:$0xff]
    %v569 = vld [vmem:[#allocation4 + $0x1a8] sm:$0xff]
    %v570 = vld [vmem:[#allocation4 + $0x1b0] sm:$0xff]
    %v571 = vld [vmem:[#allocation4 + $0x1b8] sm:$0xff]
    %v572 = vld [vmem:[#allocation4 + $0x1c0] sm:$0xff]
    %v573 = vld [vmem:[#allocation4 + $0x1c8] sm:$0xff]
    %v574 = vld [vmem:[#allocation4 + $0x1d0] sm:$0xff]
    %v575 = vld [vmem:[#allocation4 + $0x1d8] sm:$0xff]
    %v576 = vld [vmem:[#allocation4 + $0x1e0] sm:$0xff]
    %v577 = vld [vmem:[#allocation4 + $0x1e8] sm:$0xff]
    %v578 = vld [vmem:[#allocation4 + $0x1f0] sm:$0xff]
    %v579 = vld [vmem:[#allocation4 + $0x1f8] sm:$0xff]
    %v580 = vld [vmem:[#allocation4 + $0x200] sm:$0xff]
    %v581 = vld [vmem:[#allocation4 + $0x208] sm:$0xff]
    %v582 = vld [vmem:[#allocation4 + $0x210] sm:$0xff]
    %v583 = vld [vmem:[#allocation4 + $0x218] sm:$0xff]
    %v584 = vld [vmem:[#allocation4 + $0x220] sm:$0xff]
    %v585 = vld [vmem:[#allocation4 + $0x228] sm:$0xff]
    %v586 = vld [vmem:[#allocation4 + $0x230] sm:$0xff]
    %v587 = vld [vmem:[#allocation4 + $0x238] sm:$0xff]
    %v588 = vld [vmem:[#allocation4 + $0x240] sm:$0xff]
    %v589 = vld [vmem:[#allocation4 + $0x248] sm:$0xff]
    %v590 = vld [vmem:[#allocation4 + $0x250] sm:$0xff]
    %v591 = vld [vmem:[#allocation4 + $0x258] sm:$0xff]
    %v592 = vld [vmem:[#allocation4 + $0x260] sm:$0xff]
    %v593 = vld [vmem:[#allocation4 + $0x268] sm:$0xff]
    %v594 = vld [vmem:[#allocation4 + $0x270] sm:$0xff]
    %v595 = vld [vmem:[#allocation4 + $0x278] sm:$0xff]
    %v596 = vld [vmem:[#allocation4 + $0x280] sm:$0xff]
    %v597 = vld [vmem:[#allocation4 + $0x288] sm:$0xff]
    %v598 = vld [vmem:[#allocation4 + $0x290] sm:$0xff]
    %v599 = vld [vmem:[#allocation4 + $0x298] sm:$0xff]
    %v600 = vld [vmem:[#allocation4 + $0x2a0] sm:$0xff]
    %v601 = vld [vmem:[#allocation4 + $0x2a8] sm:$0xff]
    %v602 = vld [vmem:[#allocation4 + $0x2b0] sm:$0xff]
    %v603 = vld [vmem:[#allocation4 + $0x2b8] sm:$0xff]
    %v604 = vld [vmem:[#allocation4 + $0x2c0] sm:$0xff]
    %v605 = vld [vmem:[#allocation4 + $0x2c8] sm:$0xff]
    %v606 = vld [vmem:[#allocation4 + $0x2d0] sm:$0xff]
    %v607 = vld [vmem:[#allocation4 + $0x2d8] sm:$0xff]
    %v608 = vld [vmem:[#allocation4 + $0x2e0] sm:$0xff]
    %v609 = vld [vmem:[#allocation4 + $0x2e8] sm:$0xff]
    %v610 = vld [vmem:[#allocation4 + $0x2f0] sm:$0xff]
    %v611 = vld [vmem:[#allocation4 + $0x2f8] sm:$0xff]
    %v612 = vld [vmem:[#allocation4 + $0x300] sm:$0xff]
    %v613 = vld [vmem:[#allocation4 + $0x308] sm:$0xff]
    %v614 = vld [vmem:[#allocation4 + $0x310] sm:$0xff]
    %v615 = vld [vmem:[#allocation4 + $0x318] sm:$0xff]
    %v616 = vld [vmem:[#allocation4 + $0x320] sm:$0xff]
    %v617 = vld [vmem:[#allocation4 + $0x328] sm:$0xff]
    %v618 = vld [vmem:[#allocation4 + $0x330] sm:$0xff]
    %v619 = vld [vmem:[#allocation4 + $0x338] sm:$0xff]
    %v620 = vld [vmem:[#allocation4 + $0x340] sm:$0xff]
    %v621 = vld [vmem:[#allocation4 + $0x348] sm:$0xff]
    %v622 = vld [vmem:[#allocation4 + $0x350] sm:$0xff]
    %v623 = vld [vmem:[#allocation4 + $0x358] sm:$0xff]
    %v624 = vld [vmem:[#allocation4 + $0x360] sm:$0xff]
    %v625 = vld [vmem:[#allocation4 + $0x368] sm:$0xff]
    %v626 = vld [vmem:[#allocation4 + $0x370] sm:$0xff]
    %v627 = vld [vmem:[#allocation4 + $0x378] sm:$0xff]
    %v628 = vld [vmem:[#allocation4 + $0x380] sm:$0xff]
    %v629 = vld [vmem:[#allocation4 + $0x388] sm:$0xff]
    %v630 = vld [vmem:[#allocation4 + $0x390] sm:$0xff]
    %v631 = vld [vmem:[#allocation4 + $0x398] sm:$0xff]
    %v632 = vld [vmem:[#allocation4 + $0x3a0] sm:$0xff]
    %v633 = vld [vmem:[#allocation4 + $0x3a8] sm:$0xff]
    %v634 = vld [vmem:[#allocation4 + $0x3b0] sm:$0xff]
    %v635 = vld [vmem:[#allocation4 + $0x3b8] sm:$0xff]
    %v636 = vld [vmem:[#allocation4 + $0x3c0] sm:$0xff]
    %v637 = vld [vmem:[#allocation4 + $0x3c8] sm:$0xff]
    %v638 = vld [vmem:[#allocation4 + $0x3d0] sm:$0xff]
    %v639 = vld [vmem:[#allocation4 + $0x3d8] sm:$0xff]
    %v640 = vld [vmem:[#allocation4 + $0x3e0] sm:$0xff]
    %v641 = vld [vmem:[#allocation4 + $0x3e8] sm:$0xff]
    %v642 = vld [vmem:[#allocation4 + $0x3f0] sm:$0xff]
    %v643 = vld [vmem:[#allocation4 + $0x3f8] sm:$0xff]
    %v645 = vlaneseq
    %v646 = vshrl.u32 %v645, 7
    %v647 = vsub.s32 0, %v646
    %v648 = vrot.slane %v483, %v647
    %v649 = vlaneseq
    %v650 = vshrl.u32 %v649, 7
    %v651 = vsub.s32 1, %v650
    %v652 = vrot.slane %v483, %v651
    %v653 = vlaneseq
    %v654 = vshrl.u32 %v653, 7
    %v655 = vsub.s32 2, %v654
    %v656 = vrot.slane %v483, %v655
    %v657 = vlaneseq
    %v658 = vshrl.u32 %v657, 7
    %v659 = vsub.s32 3, %v658
    %v660 = vrot.slane %v483, %v659
    %v793 = vunpack.c.l.b16 %v516
    %v794 = vunpack.c.h.b16 %v516
    %v795 = vunpack.c.l.b16 %v517
    %v796 = vunpack.c.h.b16 %v517
    %v797 = vunpack.c.l.b16 %v518
    %v798 = vunpack.c.h.b16 %v518
    %v799 = vunpack.c.l.b16 %v519
    %v800 = vunpack.c.h.b16 %v519
    %v801 = vunpack.c.l.b16 %v520
    %v802 = vunpack.c.h.b16 %v520
    %v803 = vunpack.c.l.b16 %v521
    %v804 = vunpack.c.h.b16 %v521
    %v805 = vunpack.c.l.b16 %v522
    %v806 = vunpack.c.h.b16 %v522
    %v807 = vunpack.c.l.b16 %v523
    %v808 = vunpack.c.h.b16 %v523
    %v809 = vunpack.c.l.b16 %v524
    %v810 = vunpack.c.h.b16 %v524
    %v811 = vunpack.c.l.b16 %v525
    %v812 = vunpack.c.h.b16 %v525
    %v813 = vunpack.c.l.b16 %v526
    %v814 = vunpack.c.h.b16 %v526
    %v815 = vunpack.c.l.b16 %v527
    %v816 = vunpack.c.h.b16 %v527
    %v817 = vunpack.c.l.b16 %v528
    %v818 = vunpack.c.h.b16 %v528
    %v819 = vunpack.c.l.b16 %v529
    %v820 = vunpack.c.h.b16 %v529
    %v821 = vunpack.c.l.b16 %v530
    %v822 = vunpack.c.h.b16 %v530
    %v823 = vunpack.c.l.b16 %v531
    %v824 = vunpack.c.h.b16 %v531
    %v825 = vunpack.c.l.b16 %v532
    %v826 = vunpack.c.h.b16 %v532
    %v827 = vunpack.c.l.b16 %v533
    %v828 = vunpack.c.h.b16 %v533
    %v829 = vunpack.c.l.b16 %v534
    %v830 = vunpack.c.h.b16 %v534
    %v831 = vunpack.c.l.b16 %v535
    %v832 = vunpack.c.h.b16 %v535
    %v833 = vunpack.c.l.b16 %v536
    %v834 = vunpack.c.h.b16 %v536
    %v835 = vunpack.c.l.b16 %v537
    %v836 = vunpack.c.h.b16 %v537
    %v837 = vunpack.c.l.b16 %v538
    %v838 = vunpack.c.h.b16 %v538
    %v839 = vunpack.c.l.b16 %v539
    %v840 = vunpack.c.h.b16 %v539
    %v841 = vunpack.c.l.b16 %v540
    %v842 = vunpack.c.h.b16 %v540
    %v843 = vunpack.c.l.b16 %v541
    %v844 = vunpack.c.h.b16 %v541
    %v845 = vunpack.c.l.b16 %v542
    %v846 = vunpack.c.h.b16 %v542
    %v847 = vunpack.c.l.b16 %v543
    %v848 = vunpack.c.h.b16 %v543
    %v849 = vunpack.c.l.b16 %v544
    %v850 = vunpack.c.h.b16 %v544
    %v851 = vunpack.c.l.b16 %v545
    %v852 = vunpack.c.h.b16 %v545
    %v853 = vunpack.c.l.b16 %v546
    %v854 = vunpack.c.h.b16 %v546
    %v855 = vunpack.c.l.b16 %v547
    %v856 = vunpack.c.h.b16 %v547
    %v857 = vunpack.c.l.b16 %v548
    %v858 = vunpack.c.h.b16 %v548
    %v859 = vunpack.c.l.b16 %v549
    %v860 = vunpack.c.h.b16 %v549
    %v861 = vunpack.c.l.b16 %v550
    %v862 = vunpack.c.h.b16 %v550
    %v863 = vunpack.c.l.b16 %v551
    %v864 = vunpack.c.h.b16 %v551
    %v865 = vunpack.c.l.b16 %v552
    %v866 = vunpack.c.h.b16 %v552
    %v867 = vunpack.c.l.b16 %v553
    %v868 = vunpack.c.h.b16 %v553
    %v869 = vunpack.c.l.b16 %v554
    %v870 = vunpack.c.h.b16 %v554
    %v871 = vunpack.c.l.b16 %v555
    %v872 = vunpack.c.h.b16 %v555
    %v873 = vunpack.c.l.b16 %v556
    %v874 = vunpack.c.h.b16 %v556
    %v875 = vunpack.c.l.b16 %v557
    %v876 = vunpack.c.h.b16 %v557
    %v877 = vunpack.c.l.b16 %v558
    %v878 = vunpack.c.h.b16 %v558
    %v879 = vunpack.c.l.b16 %v559
    %v880 = vunpack.c.h.b16 %v559
    %v881 = vunpack.c.l.b16 %v560
    %v882 = vunpack.c.h.b16 %v560
    %v883 = vunpack.c.l.b16 %v561
    %v884 = vunpack.c.h.b16 %v561
    %v885 = vunpack.c.l.b16 %v562
    %v886 = vunpack.c.h.b16 %v562
    %v887 = vunpack.c.l.b16 %v563
    %v888 = vunpack.c.h.b16 %v563
    %v889 = vunpack.c.l.b16 %v564
    %v890 = vunpack.c.h.b16 %v564
    %v891 = vunpack.c.l.b16 %v565
    %v892 = vunpack.c.h.b16 %v565
    %v893 = vunpack.c.l.b16 %v566
    %v894 = vunpack.c.h.b16 %v566
    %v895 = vunpack.c.l.b16 %v567
    %v896 = vunpack.c.h.b16 %v567
    %v897 = vunpack.c.l.b16 %v568
    %v898 = vunpack.c.h.b16 %v568
    %v899 = vunpack.c.l.b16 %v569
    %v900 = vunpack.c.h.b16 %v569
    %v901 = vunpack.c.l.b16 %v570
    %v902 = vunpack.c.h.b16 %v570
    %v903 = vunpack.c.l.b16 %v571
    %v904 = vunpack.c.h.b16 %v571
    %v905 = vunpack.c.l.b16 %v572
    %v906 = vunpack.c.h.b16 %v572
    %v907 = vunpack.c.l.b16 %v573
    %v908 = vunpack.c.h.b16 %v573
    %v909 = vunpack.c.l.b16 %v574
    %v910 = vunpack.c.h.b16 %v574
    %v911 = vunpack.c.l.b16 %v575
    %v912 = vunpack.c.h.b16 %v575
    %v913 = vunpack.c.l.b16 %v576
    %v914 = vunpack.c.h.b16 %v576
    %v915 = vunpack.c.l.b16 %v577
    %v916 = vunpack.c.h.b16 %v577
    %v917 = vunpack.c.l.b16 %v578
    %v918 = vunpack.c.h.b16 %v578
    %v919 = vunpack.c.l.b16 %v579
    %v920 = vunpack.c.h.b16 %v579
    %v921 = vunpack.c.l.b16 %v580
    %v922 = vunpack.c.h.b16 %v580
    %v923 = vunpack.c.l.b16 %v581
    %v924 = vunpack.c.h.b16 %v581
    %v925 = vunpack.c.l.b16 %v582
    %v926 = vunpack.c.h.b16 %v582
    %v927 = vunpack.c.l.b16 %v583
    %v928 = vunpack.c.h.b16 %v583
    %v929 = vunpack.c.l.b16 %v584
    %v930 = vunpack.c.h.b16 %v584
    %v931 = vunpack.c.l.b16 %v585
    %v932 = vunpack.c.h.b16 %v585
    %v933 = vunpack.c.l.b16 %v586
    %v934 = vunpack.c.h.b16 %v586
    %v935 = vunpack.c.l.b16 %v587
    %v936 = vunpack.c.h.b16 %v587
    %v937 = vunpack.c.l.b16 %v588
    %v938 = vunpack.c.h.b16 %v588
    %v939 = vunpack.c.l.b16 %v589
    %v940 = vunpack.c.h.b16 %v589
    %v941 = vunpack.c.l.b16 %v590
    %v942 = vunpack.c.h.b16 %v590
    %v943 = vunpack.c.l.b16 %v591
    %v944 = vunpack.c.h.b16 %v591
    %v945 = vunpack.c.l.b16 %v592
    %v946 = vunpack.c.h.b16 %v592
    %v947 = vunpack.c.l.b16 %v593
    %v948 = vunpack.c.h.b16 %v593
    %v949 = vunpack.c.l.b16 %v594
    %v950 = vunpack.c.h.b16 %v594
    %v951 = vunpack.c.l.b16 %v595
    %v952 = vunpack.c.h.b16 %v595
    %v953 = vunpack.c.l.b16 %v596
    %v954 = vunpack.c.h.b16 %v596
    %v955 = vunpack.c.l.b16 %v597
    %v956 = vunpack.c.h.b16 %v597
    %v957 = vunpack.c.l.b16 %v598
    %v958 = vunpack.c.h.b16 %v598
    %v959 = vunpack.c.l.b16 %v599
    %v960 = vunpack.c.h.b16 %v599
    %v961 = vunpack.c.l.b16 %v600
    %v962 = vunpack.c.h.b16 %v600
    %v963 = vunpack.c.l.b16 %v601
    %v964 = vunpack.c.h.b16 %v601
    %v965 = vunpack.c.l.b16 %v602
    %v966 = vunpack.c.h.b16 %v602
    %v967 = vunpack.c.l.b16 %v603
    %v968 = vunpack.c.h.b16 %v603
    %v969 = vunpack.c.l.b16 %v604
    %v970 = vunpack.c.h.b16 %v604
    %v971 = vunpack.c.l.b16 %v605
    %v972 = vunpack.c.h.b16 %v605
    %v973 = vunpack.c.l.b16 %v606
    %v974 = vunpack.c.h.b16 %v606
    %v975 = vunpack.c.l.b16 %v607
    %v976 = vunpack.c.h.b16 %v607
    %v977 = vunpack.c.l.b16 %v608
    %v978 = vunpack.c.h.b16 %v608
    %v979 = vunpack.c.l.b16 %v609
    %v980 = vunpack.c.h.b16 %v609
    %v981 = vunpack.c.l.b16 %v610
    %v982 = vunpack.c.h.b16 %v610
    %v983 = vunpack.c.l.b16 %v611
    %v984 = vunpack.c.h.b16 %v611
    %v985 = vunpack.c.l.b16 %v612
    %v986 = vunpack.c.h.b16 %v612
    %v987 = vunpack.c.l.b16 %v613
    %v988 = vunpack.c.h.b16 %v613
    %v989 = vunpack.c.l.b16 %v614
    %v990 = vunpack.c.h.b16 %v614
    %v991 = vunpack.c.l.b16 %v615
    %v992 = vunpack.c.h.b16 %v615
    %v993 = vunpack.c.l.b16 %v616
    %v994 = vunpack.c.h.b16 %v616
    %v995 = vunpack.c.l.b16 %v617
    %v996 = vunpack.c.h.b16 %v617
    %v997 = vunpack.c.l.b16 %v618
    %v998 = vunpack.c.h.b16 %v618
    %v999 = vunpack.c.l.b16 %v619
    %v1000 = vunpack.c.h.b16 %v619
    %v1001 = vunpack.c.l.b16 %v620
    %v1002 = vunpack.c.h.b16 %v620
    %v1003 = vunpack.c.l.b16 %v621
    %v1004 = vunpack.c.h.b16 %v621
    %v1005 = vunpack.c.l.b16 %v622
    %v1006 = vunpack.c.h.b16 %v622
    %v1007 = vunpack.c.l.b16 %v623
    %v1008 = vunpack.c.h.b16 %v623
    %v1009 = vunpack.c.l.b16 %v624
    %v1010 = vunpack.c.h.b16 %v624
    %v1011 = vunpack.c.l.b16 %v625
    %v1012 = vunpack.c.h.b16 %v625
    %v1013 = vunpack.c.l.b16 %v626
    %v1014 = vunpack.c.h.b16 %v626
    %v1015 = vunpack.c.l.b16 %v627
    %v1016 = vunpack.c.h.b16 %v627
    %v1017 = vunpack.c.l.b16 %v628
    %v1018 = vunpack.c.h.b16 %v628
    %v1019 = vunpack.c.l.b16 %v629
    %v1020 = vunpack.c.h.b16 %v629
    %v1021 = vunpack.c.l.b16 %v630
    %v1022 = vunpack.c.h.b16 %v630
    %v1023 = vunpack.c.l.b16 %v631
    %v1024 = vunpack.c.h.b16 %v631
    %v1025 = vunpack.c.l.b16 %v632
    %v1026 = vunpack.c.h.b16 %v632
    %v1027 = vunpack.c.l.b16 %v633
    %v1028 = vunpack.c.h.b16 %v633
    %v1029 = vunpack.c.l.b16 %v634
    %v1030 = vunpack.c.h.b16 %v634
    %v1031 = vunpack.c.l.b16 %v635
    %v1032 = vunpack.c.h.b16 %v635
    %v1033 = vunpack.c.l.b16 %v636
    %v1034 = vunpack.c.h.b16 %v636
    %v1035 = vunpack.c.l.b16 %v637
    %v1036 = vunpack.c.h.b16 %v637
    %v1037 = vunpack.c.l.b16 %v638
    %v1038 = vunpack.c.h.b16 %v638
    %v1039 = vunpack.c.l.b16 %v639
    %v1040 = vunpack.c.h.b16 %v639
    %v1041 = vunpack.c.l.b16 %v640
    %v1042 = vunpack.c.h.b16 %v640
    %v1043 = vunpack.c.l.b16 %v641
    %v1044 = vunpack.c.h.b16 %v641
    %v1045 = vunpack.c.l.b16 %v642
    %v1046 = vunpack.c.h.b16 %v642
    %v1047 = vunpack.c.l.b16 %v643
    %v1048 = vunpack.c.h.b16 %v643
    %v1049 = vpack.c.b16 %v797, %v793
    %v1050 = vpack.c.b16 %v798, %v794
    %v1051 = vpack.c.b16 %v799, %v795
    %v1052 = vpack.c.b16 %v800, %v796
    %v1053 = vpack.c.b16 %v805, %v801
    %v1054 = vpack.c.b16 %v806, %v802
    %v1055 = vpack.c.b16 %v807, %v803
    %v1056 = vpack.c.b16 %v808, %v804
    %v1057 = vpack.c.b16 %v813, %v809
    %v1058 = vpack.c.b16 %v814, %v810
    %v1059 = vpack.c.b16 %v815, %v811
    %v1060 = vpack.c.b16 %v816, %v812
    %v1061 = vpack.c.b16 %v821, %v817
    %v1062 = vpack.c.b16 %v822, %v818
    %v1063 = vpack.c.b16 %v823, %v819
    %v1064 = vpack.c.b16 %v824, %v820
    %v1065 = vpack.c.b16 %v829, %v825
    %v1066 = vpack.c.b16 %v830, %v826
    %v1067 = vpack.c.b16 %v831, %v827
    %v1068 = vpack.c.b16 %v832, %v828
    %v1069 = vpack.c.b16 %v837, %v833
    %v1070 = vpack.c.b16 %v838, %v834
    %v1071 = vpack.c.b16 %v839, %v835
    %v1072 = vpack.c.b16 %v840, %v836
    %v1073 = vpack.c.b16 %v845, %v841
    %v1074 = vpack.c.b16 %v846, %v842
    %v1075 = vpack.c.b16 %v847, %v843
    %v1076 = vpack.c.b16 %v848, %v844
    %v1077 = vpack.c.b16 %v853, %v849
    %v1078 = vpack.c.b16 %v854, %v850
    %v1079 = vpack.c.b16 %v855, %v851
    %v1080 = vpack.c.b16 %v856, %v852
    %v1081 = vpack.c.b16 %v861, %v857
    %v1082 = vpack.c.b16 %v862, %v858
    %v1083 = vpack.c.b16 %v863, %v859
    %v1084 = vpack.c.b16 %v864, %v860
    %v1085 = vpack.c.b16 %v869, %v865
    %v1086 = vpack.c.b16 %v870, %v866
    %v1087 = vpack.c.b16 %v871, %v867
    %v1088 = vpack.c.b16 %v872, %v868
    %v1089 = vpack.c.b16 %v877, %v873
    %v1090 = vpack.c.b16 %v878, %v874
    %v1091 = vpack.c.b16 %v879, %v875
    %v1092 = vpack.c.b16 %v880, %v876
    %v1093 = vpack.c.b16 %v885, %v881
    %v1094 = vpack.c.b16 %v886, %v882
    %v1095 = vpack.c.b16 %v887, %v883
    %v1096 = vpack.c.b16 %v888, %v884
    %v1097 = vpack.c.b16 %v893, %v889
    %v1098 = vpack.c.b16 %v894, %v890
    %v1099 = vpack.c.b16 %v895, %v891
    %v1100 = vpack.c.b16 %v896, %v892
    %v1101 = vpack.c.b16 %v901, %v897
    %v1102 = vpack.c.b16 %v902, %v898
    %v1103 = vpack.c.b16 %v903, %v899
    %v1104 = vpack.c.b16 %v904, %v900
    %v1105 = vpack.c.b16 %v909, %v905
    %v1106 = vpack.c.b16 %v910, %v906
    %v1107 = vpack.c.b16 %v911, %v907
    %v1108 = vpack.c.b16 %v912, %v908
    %v1109 = vpack.c.b16 %v917, %v913
    %v1110 = vpack.c.b16 %v918, %v914
    %v1111 = vpack.c.b16 %v919, %v915
    %v1112 = vpack.c.b16 %v920, %v916
    %v1113 = vpack.c.b16 %v925, %v921
    %v1114 = vpack.c.b16 %v926, %v922
    %v1115 = vpack.c.b16 %v927, %v923
    %v1116 = vpack.c.b16 %v928, %v924
    %v1117 = vpack.c.b16 %v933, %v929
    %v1118 = vpack.c.b16 %v934, %v930
    %v1119 = vpack.c.b16 %v935, %v931
    %v1120 = vpack.c.b16 %v936, %v932
    %v1121 = vpack.c.b16 %v941, %v937
    %v1122 = vpack.c.b16 %v942, %v938
    %v1123 = vpack.c.b16 %v943, %v939
    %v1124 = vpack.c.b16 %v944, %v940
    %v1125 = vpack.c.b16 %v949, %v945
    %v1126 = vpack.c.b16 %v950, %v946
    %v1127 = vpack.c.b16 %v951, %v947
    %v1128 = vpack.c.b16 %v952, %v948
    %v1129 = vpack.c.b16 %v957, %v953
    %v1130 = vpack.c.b16 %v958, %v954
    %v1131 = vpack.c.b16 %v959, %v955
    %v1132 = vpack.c.b16 %v960, %v956
    %v1133 = vpack.c.b16 %v965, %v961
    %v1134 = vpack.c.b16 %v966, %v962
    %v1135 = vpack.c.b16 %v967, %v963
    %v1136 = vpack.c.b16 %v968, %v964
    %v1137 = vpack.c.b16 %v973, %v969
    %v1138 = vpack.c.b16 %v974, %v970
    %v1139 = vpack.c.b16 %v975, %v971
    %v1140 = vpack.c.b16 %v976, %v972
    %v1141 = vpack.c.b16 %v981, %v977
    %v1142 = vpack.c.b16 %v982, %v978
    %v1143 = vpack.c.b16 %v983, %v979
    %v1144 = vpack.c.b16 %v984, %v980
    %v1145 = vpack.c.b16 %v989, %v985
    %v1146 = vpack.c.b16 %v990, %v986
    %v1147 = vpack.c.b16 %v991, %v987
    %v1148 = vpack.c.b16 %v992, %v988
    %v1149 = vpack.c.b16 %v997, %v993
    %v1150 = vpack.c.b16 %v998, %v994
    %v1151 = vpack.c.b16 %v999, %v995
    %v1152 = vpack.c.b16 %v1000, %v996
    %v1153 = vpack.c.b16 %v1005, %v1001
    %v1154 = vpack.c.b16 %v1006, %v1002
    %v1155 = vpack.c.b16 %v1007, %v1003
    %v1156 = vpack.c.b16 %v1008, %v1004
    %v1157 = vpack.c.b16 %v1013, %v1009
    %v1158 = vpack.c.b16 %v1014, %v1010
    %v1159 = vpack.c.b16 %v1015, %v1011
    %v1160 = vpack.c.b16 %v1016, %v1012
    %v1161 = vpack.c.b16 %v1021, %v1017
    %v1162 = vpack.c.b16 %v1022, %v1018
    %v1163 = vpack.c.b16 %v1023, %v1019
    %v1164 = vpack.c.b16 %v1024, %v1020
    %v1165 = vpack.c.b16 %v1029, %v1025
    %v1166 = vpack.c.b16 %v1030, %v1026
    %v1167 = vpack.c.b16 %v1031, %v1027
    %v1168 = vpack.c.b16 %v1032, %v1028
    %v1169 = vpack.c.b16 %v1037, %v1033
    %v1170 = vpack.c.b16 %v1038, %v1034
    %v1171 = vpack.c.b16 %v1039, %v1035
    %v1172 = vpack.c.b16 %v1040, %v1036
    %v1173 = vpack.c.b16 %v1045, %v1041
    %v1174 = vpack.c.b16 %v1046, %v1042
    %v1175 = vpack.c.b16 %v1047, %v1043
    %v1176 = vpack.c.b16 %v1048, %v1044
    %1305 = vmatprep.subr.bf16.mxu0 %v1050
    %1306 = vmatpush1.bf16.msra.mxu0 %v1049
    %1307 = vmatprep.subr.bf16.mxu0 %v1054
    %1308 = vmatpush1.bf16.msra.mxu0 %v1053
    %1309 = vmatprep.subr.bf16.mxu0 %v1058
    %1310 = vmatpush1.bf16.msra.mxu0 %v1057
    %1311 = vmatprep.subr.bf16.mxu0 %v1062
    %1312 = vmatpush1.bf16.msra.mxu0 %v1061
    %1313 = vmatprep.subr.bf16.mxu0 %v1066
    %1314 = vmatpush1.bf16.msra.mxu0 %v1065
    %1315 = vmatprep.subr.bf16.mxu0 %v1070
    %1316 = vmatpush1.bf16.msra.mxu0 %v1069
    %1317 = vmatprep.subr.bf16.mxu0 %v1074
    %1318 = vmatpush1.bf16.msra.mxu0 %v1073
    %1319 = vmatprep.subr.bf16.mxu0 %v1078
    %1320 = vmatpush1.bf16.msra.mxu0 %v1077
    %1321 = vmatprep.subr.bf16.mxu0 %v1082
    %1322 = vmatpush1.bf16.msra.mxu0 %v1081
    %1323 = vmatprep.subr.bf16.mxu0 %v1086
    %1324 = vmatpush1.bf16.msra.mxu0 %v1085
    %1325 = vmatprep.subr.bf16.mxu0 %v1090
    %1326 = vmatpush1.bf16.msra.mxu0 %v1089
    %1327 = vmatprep.subr.bf16.mxu0 %v1094
    %1328 = vmatpush1.bf16.msra.mxu0 %v1093
    %1329 = vmatprep.subr.bf16.mxu0 %v1098
    %1330 = vmatpush1.bf16.msra.mxu0 %v1097
    %1331 = vmatprep.subr.bf16.mxu0 %v1102
    %1332 = vmatpush1.bf16.msra.mxu0 %v1101
    %1333 = vmatprep.subr.bf16.mxu0 %v1106
    %1334 = vmatpush1.bf16.msra.mxu0 %v1105
    %1335 = vmatprep.subr.bf16.mxu0 %v1110
    %1336 = vmatpush1.bf16.msra.mxu0 %v1109
    %1337 = vmatprep.mubr.bf16.mxu0 %v485
    %1338 = vmatmul.mubr.bf16.gmra.mrb[0].mxu0 %v484
    %v1339 = vpop.f32.mrb[0].mxu0
    %v1340 = vadd.f32 %v648, %v1339
    %v1341 = vpop.f32.mrb[0].mxu0
    %v1342 = vadd.f32 %v652, %v1341
    %v1343 = vpop.f32.mrb[0].mxu0
    %v1344 = vadd.f32 %v648, %v1343
    %v1345 = vpop.f32.mrb[0].mxu0
    %v1346 = vadd.f32 %v652, %v1345
    %1347 = vmatprep.mubr.bf16.mxu0 %v489
    %1348 = vmatmul.mubr.bf16.gmra.mrb[0].mxu0 %v488
    %v1349 = vpop.f32.mrb[0].mxu0
    %v1350 = vadd.f32 %v648, %v1349
    %v1351 = vpop.f32.mrb[0].mxu0
    %v1352 = vadd.f32 %v652, %v1351
    %v1353 = vpop.f32.mrb[0].mxu0
    %v1354 = vadd.f32 %v648, %v1353
    %v1355 = vpop.f32.mrb[0].mxu0
    %v1356 = vadd.f32 %v652, %v1355
    %1357 = vmatprep.mubr.bf16.mxu0 %v493
    %1358 = vmatmul.mubr.bf16.gmra.mrb[0].mxu0 %v492
    %v1359 = vpop.f32.mrb[0].mxu0
    %v1360 = vadd.f32 %v648, %v1359
    %v1361 = vpop.f32.mrb[0].mxu0
    %v1362 = vadd.f32 %v652, %v1361
    %v1363 = vpop.f32.mrb[0].mxu0
    %v1364 = vadd.f32 %v648, %v1363
    %v1365 = vpop.f32.mrb[0].mxu0
    %v1366 = vadd.f32 %v652, %v1365
    %1367 = vmatprep.mubr.bf16.mxu0 %v497
    %1368 = vmatmul.mubr.bf16.gmra.mrb[0].mxu0 %v496
    %v1369 = vpop.f32.mrb[0].mxu0
    %v1370 = vadd.f32 %v648, %v1369
    %v1371 = vpop.f32.mrb[0].mxu0
    %v1372 = vadd.f32 %v652, %v1371
    %v1373 = vpop.f32.mrb[0].mxu0
    %v1374 = vadd.f32 %v648, %v1373
    %v1375 = vpop.f32.mrb[0].mxu0
    %v1376 = vadd.f32 %v652, %v1375
    %1377 = vmatprep.mubr.bf16.mxu0 %v501
    %1378 = vmatmul.mubr.bf16.gmra.mrb[0].mxu0 %v500
    %v1379 = vpop.f32.mrb[0].mxu0
    %v1380 = vadd.f32 %v648, %v1379
    %v1381 = vpop.f32.mrb[0].mxu0
    %v1382 = vadd.f32 %v652, %v1381
    %v1383 = vpop.f32.mrb[0].mxu0
    %v1384 = vadd.f32 %v648, %v1383
    %v1385 = vpop.f32.mrb[0].mxu0
    %v1386 = vadd.f32 %v652, %v1385
    %1387 = vmatprep.mubr.bf16.mxu0 %v505
    %1388 = vmatmul.mubr.bf16.gmra.mrb[0].mxu0 %v504
    %v1389 = vpop.f32.mrb[0].mxu0
    %v1390 = vadd.f32 %v648, %v1389
    %v1391 = vpop.f32.mrb[0].mxu0
    %v1392 = vadd.f32 %v652, %v1391
    %v1393 = vpop.f32.mrb[0].mxu0
    %v1394 = vadd.f32 %v648, %v1393
    %v1395 = vpop.f32.mrb[0].mxu0
    %v1396 = vadd.f32 %v652, %v1395
    %1397 = vmatprep.mubr.bf16.mxu0 %v509
    %1398 = vmatmul.mubr.bf16.gmra.mrb[0].mxu0 %v508
    %v1399 = vpop.f32.mrb[0].mxu0
    %v1400 = vadd.f32 %v648, %v1399
    %v1401 = vpop.f32.mrb[0].mxu0
    %v1402 = vadd.f32 %v652, %v1401
    %v1403 = vpop.f32.mrb[0].mxu0
    %v1404 = vadd.f32 %v648, %v1403
    %v1405 = vpop.f32.mrb[0].mxu0
    %v1406 = vadd.f32 %v652, %v1405
    %1407 = vmatprep.mubr.bf16.mxu0 %v513
    %1408 = vmatmul.mubr.bf16.gmra.mrb[0].mxu0 %v512
    %v1409 = vpop.f32.mrb[0].mxu0
    %v1410 = vadd.f32 %v648, %v1409
    %v1411 = vpop.f32.mrb[0].mxu0
    %v1412 = vadd.f32 %v652, %v1411
    %v1413 = vpop.f32.mrb[0].mxu0
    %v1414 = vadd.f32 %v648, %v1413
    %v1415 = vpop.f32.mrb[0].mxu0
    %v1416 = vadd.f32 %v652, %v1415
    %1417 = vdwg.mxu0
    %1418 = vmatprep.subr.bf16.mxu0 %v1114
    %1419 = vmatpush1.bf16.msra.mxu0 %v1113
    %1420 = vmatprep.subr.bf16.mxu0 %v1118
    %1421 = vmatpush1.bf16.msra.mxu0 %v1117
    %1422 = vmatprep.subr.bf16.mxu0 %v1122
    %1423 = vmatpush1.bf16.msra.mxu0 %v1121
    %1424 = vmatprep.subr.bf16.mxu0 %v1126
    %1425 = vmatpush1.bf16.msra.mxu0 %v1125
    %1426 = vmatprep.subr.bf16.mxu0 %v1130
    %1427 = vmatpush1.bf16.msra.mxu0 %v1129
    %1428 = vmatprep.subr.bf16.mxu0 %v1134
    %1429 = vmatpush1.bf16.msra.mxu0 %v1133
    %1430 = vmatprep.subr.bf16.mxu0 %v1138
    %1431 = vmatpush1.bf16.msra.mxu0 %v1137
    %1432 = vmatprep.subr.bf16.mxu0 %v1142
    %1433 = vmatpush1.bf16.msra.mxu0 %v1141
    %1434 = vmatprep.subr.bf16.mxu0 %v1146
    %1435 = vmatpush1.bf16.msra.mxu0 %v1145
    %1436 = vmatprep.subr.bf16.mxu0 %v1150
    %1437 = vmatpush1.bf16.msra.mxu0 %v1149
    %1438 = vmatprep.subr.bf16.mxu0 %v1154
    %1439 = vmatpush1.bf16.msra.mxu0 %v1153
    %1440 = vmatprep.subr.bf16.mxu0 %v1158
    %1441 = vmatpush1.bf16.msra.mxu0 %v1157
    %1442 = vmatprep.subr.bf16.mxu0 %v1162
    %1443 = vmatpush1.bf16.msra.mxu0 %v1161
    %1444 = vmatprep.subr.bf16.mxu0 %v1166
    %1445 = vmatpush1.bf16.msra.mxu0 %v1165
    %1446 = vmatprep.subr.bf16.mxu0 %v1170
    %1447 = vmatpush1.bf16.msra.mxu0 %v1169
    %1448 = vmatprep.subr.bf16.mxu0 %v1174
    %1449 = vmatpush1.bf16.msra.mxu0 %v1173
    %1450 = vmatprep.mubr.bf16.mxu0 %v487
    %1451 = vmatmul.mubr.bf16.gmra.mrb[0].mxu0 %v486
    %v1452 = vpop.f32.mrb[0].mxu0
    %v1453 = vadd.f32 %v1340, %v1452
    %v1454 = vpop.f32.mrb[0].mxu0
    %v1455 = vadd.f32 %v1342, %v1454
    %v1456 = vpop.f32.mrb[0].mxu0
    %v1457 = vadd.f32 %v1344, %v1456
    %v1458 = vpop.f32.mrb[0].mxu0
    %v1459 = vadd.f32 %v1346, %v1458
    %1460 = vmatprep.mubr.bf16.mxu0 %v491
    %1461 = vmatmul.mubr.bf16.gmra.mrb[0].mxu0 %v490
    %v1462 = vpop.f32.mrb[0].mxu0
    %v1463 = vadd.f32 %v1350, %v1462
    %v1464 = vpop.f32.mrb[0].mxu0
    %v1465 = vadd.f32 %v1352, %v1464
    %v1466 = vpop.f32.mrb[0].mxu0
    %v1467 = vadd.f32 %v1354, %v1466
    %v1468 = vpop.f32.mrb[0].mxu0
    %v1469 = vadd.f32 %v1356, %v1468
    %1470 = vmatprep.mubr.bf16.mxu0 %v495
    %1471 = vmatmul.mubr.bf16.gmra.mrb[0].mxu0 %v494
    %v1472 = vpop.f32.mrb[0].mxu0
    %v1473 = vadd.f32 %v1360, %v1472
    %v1474 = vpop.f32.mrb[0].mxu0
    %v1475 = vadd.f32 %v1362, %v1474
    %v1476 = vpop.f32.mrb[0].mxu0
    %v1477 = vadd.f32 %v1364, %v1476
    %v1478 = vpop.f32.mrb[0].mxu0
    %v1479 = vadd.f32 %v1366, %v1478
    %1480 = vmatprep.mubr.bf16.mxu0 %v499
    %1481 = vmatmul.mubr.bf16.gmra.mrb[0].mxu0 %v498
    %v1482 = vpop.f32.mrb[0].mxu0
    %v1483 = vadd.f32 %v1370, %v1482
    %v1484 = vpop.f32.mrb[0].mxu0
    %v1485 = vadd.f32 %v1372, %v1484
    %v1486 = vpop.f32.mrb[0].mxu0
    %v1487 = vadd.f32 %v1374, %v1486
    %v1488 = vpop.f32.mrb[0].mxu0
    %v1489 = vadd.f32 %v1376, %v1488
    %1490 = vmatprep.mubr.bf16.mxu0 %v503
    %1491 = vmatmul.mubr.bf16.gmra.mrb[0].mxu0 %v502
    %v1492 = vpop.f32.mrb[0].mxu0
    %v1493 = vadd.f32 %v1380, %v1492
    %v1494 = vpop.f32.mrb[0].mxu0
    %v1495 = vadd.f32 %v1382, %v1494
    %v1496 = vpop.f32.mrb[0].mxu0
    %v1497 = vadd.f32 %v1384, %v1496
    %v1498 = vpop.f32.mrb[0].mxu0
    %v1499 = vadd.f32 %v1386, %v1498
    %1500 = vmatprep.mubr.bf16.mxu0 %v507
    %1501 = vmatmul.mubr.bf16.gmra.mrb[0].mxu0 %v506
    %v1502 = vpop.f32.mrb[0].mxu0
    %v1503 = vadd.f32 %v1390, %v1502
    %v1504 = vpop.f32.mrb[0].mxu0
    %v1505 = vadd.f32 %v1392, %v1504
    %v1506 = vpop.f32.mrb[0].mxu0
    %v1507 = vadd.f32 %v1394, %v1506
    %v1508 = vpop.f32.mrb[0].mxu0
    %v1509 = vadd.f32 %v1396, %v1508
    %1510 = vmatprep.mubr.bf16.mxu0 %v511
    %1511 = vmatmul.mubr.bf16.gmra.mrb[0].mxu0 %v510
    %v1512 = vpop.f32.mrb[0].mxu0
    %v1513 = vadd.f32 %v1400, %v1512
    %v1514 = vpop.f32.mrb[0].mxu0
    %v1515 = vadd.f32 %v1402, %v1514
    %v1516 = vpop.f32.mrb[0].mxu0
    %v1517 = vadd.f32 %v1404, %v1516
    %v1518 = vpop.f32.mrb[0].mxu0
    %v1519 = vadd.f32 %v1406, %v1518
    %1520 = vmatprep.mubr.bf16.mxu0 %v515
    %1521 = vmatmul.mubr.bf16.gmra.mrb[0].mxu0 %v514
    %v1522 = vpop.f32.mrb[0].mxu0
    %v1523 = vadd.f32 %v1410, %v1522
    %v1524 = vpop.f32.mrb[0].mxu0
    %v1525 = vadd.f32 %v1412, %v1524
    %v1526 = vpop.f32.mrb[0].mxu0
    %v1527 = vadd.f32 %v1414, %v1526
    %v1528 = vpop.f32.mrb[0].mxu0
    %v1529 = vadd.f32 %v1416, %v1528
    %1530 = vdwg.mxu0
    %1531 = vmatprep.subr.bf16.mxu0 %v1052
    %1532 = vmatpush1.bf16.msra.mxu0 %v1051
    %1533 = vmatprep.subr.bf16.mxu0 %v1056
    %1534 = vmatpush1.bf16.msra.mxu0 %v1055
    %1535 = vmatprep.subr.bf16.mxu0 %v1060
    %1536 = vmatpush1.bf16.msra.mxu0 %v1059
    %1537 = vmatprep.subr.bf16.mxu0 %v1064
    %1538 = vmatpush1.bf16.msra.mxu0 %v1063
    %1539 = vmatprep.subr.bf16.mxu0 %v1068
    %1540 = vmatpush1.bf16.msra.mxu0 %v1067
    %1541 = vmatprep.subr.bf16.mxu0 %v1072
    %1542 = vmatpush1.bf16.msra.mxu0 %v1071
    %1543 = vmatprep.subr.bf16.mxu0 %v1076
    %1544 = vmatpush1.bf16.msra.mxu0 %v1075
    %1545 = vmatprep.subr.bf16.mxu0 %v1080
    %1546 = vmatpush1.bf16.msra.mxu0 %v1079
    %1547 = vmatprep.subr.bf16.mxu0 %v1084
    %1548 = vmatpush1.bf16.msra.mxu0 %v1083
    %1549 = vmatprep.subr.bf16.mxu0 %v1088
    %1550 = vmatpush1.bf16.msra.mxu0 %v1087
    %1551 = vmatprep.subr.bf16.mxu0 %v1092
    %1552 = vmatpush1.bf16.msra.mxu0 %v1091
    %1553 = vmatprep.subr.bf16.mxu0 %v1096
    %1554 = vmatpush1.bf16.msra.mxu0 %v1095
    %1555 = vmatprep.subr.bf16.mxu0 %v1100
    %1556 = vmatpush1.bf16.msra.mxu0 %v1099
    %1557 = vmatprep.subr.bf16.mxu0 %v1104
    %1558 = vmatpush1.bf16.msra.mxu0 %v1103
    %1559 = vmatprep.subr.bf16.mxu0 %v1108
    %1560 = vmatpush1.bf16.msra.mxu0 %v1107
    %1561 = vmatprep.subr.bf16.mxu0 %v1112
    %1562 = vmatpush1.bf16.msra.mxu0 %v1111
    %1563 = vmatprep.mubr.bf16.mxu0 %v485
    %1564 = vmatmul.mubr.bf16.gmra.mrb[0].mxu0 %v484
    %v1565 = vpop.f32.mrb[0].mxu0
    %v1566 = vadd.f32 %v656, %v1565
    %v1567 = vpop.f32.mrb[0].mxu0
    %v1568 = vadd.f32 %v660, %v1567
    %v1569 = vpop.f32.mrb[0].mxu0
    %v1570 = vadd.f32 %v656, %v1569
    %v1571 = vpop.f32.mrb[0].mxu0
    %v1572 = vadd.f32 %v660, %v1571
    %1573 = vmatprep.mubr.bf16.mxu0 %v489
    %1574 = vmatmul.mubr.bf16.gmra.mrb[0].mxu0 %v488
    %v1575 = vpop.f32.mrb[0].mxu0
    %v1576 = vadd.f32 %v656, %v1575
    %v1577 = vpop.f32.mrb[0].mxu0
    %v1578 = vadd.f32 %v660, %v1577
    %v1579 = vpop.f32.mrb[0].mxu0
    %v1580 = vadd.f32 %v656, %v1579
    %v1581 = vpop.f32.mrb[0].mxu0
    %v1582 = vadd.f32 %v660, %v1581
    %1583 = vmatprep.mubr.bf16.mxu0 %v493
    %1584 = vmatmul.mubr.bf16.gmra.mrb[0].mxu0 %v492
    %v1585 = vpop.f32.mrb[0].mxu0
    %v1586 = vadd.f32 %v656, %v1585
    %v1587 = vpop.f32.mrb[0].mxu0
    %v1588 = vadd.f32 %v660, %v1587
    %v1589 = vpop.f32.mrb[0].mxu0
    %v1590 = vadd.f32 %v656, %v1589
    %v1591 = vpop.f32.mrb[0].mxu0
    %v1592 = vadd.f32 %v660, %v1591
    %1593 = vmatprep.mubr.bf16.mxu0 %v497
    %1594 = vmatmul.mubr.bf16.gmra.mrb[0].mxu0 %v496
    %v1595 = vpop.f32.mrb[0].mxu0
    %v1596 = vadd.f32 %v656, %v1595
    %v1597 = vpop.f32.mrb[0].mxu0
    %v1598 = vadd.f32 %v660, %v1597
    %v1599 = vpop.f32.mrb[0].mxu0
    %v1600 = vadd.f32 %v656, %v1599
    %v1601 = vpop.f32.mrb[0].mxu0
    %v1602 = vadd.f32 %v660, %v1601
    %1603 = vmatprep.mubr.bf16.mxu0 %v501
    %1604 = vmatmul.mubr.bf16.gmra.mrb[0].mxu0 %v500
    %v1605 = vpop.f32.mrb[0].mxu0
    %v1606 = vadd.f32 %v656, %v1605
    %v1607 = vpop.f32.mrb[0].mxu0
    %v1608 = vadd.f32 %v660, %v1607
    %v1609 = vpop.f32.mrb[0].mxu0
    %v1610 = vadd.f32 %v656, %v1609
    %v1611 = vpop.f32.mrb[0].mxu0
    %v1612 = vadd.f32 %v660, %v1611
    %1613 = vmatprep.mubr.bf16.mxu0 %v505
    %1614 = vmatmul.mubr.bf16.gmra.mrb[0].mxu0 %v504
    %v1615 = vpop.f32.mrb[0].mxu0
    %v1616 = vadd.f32 %v656, %v1615
    %v1617 = vpop.f32.mrb[0].mxu0
    %v1618 = vadd.f32 %v660, %v1617
    %v1619 = vpop.f32.mrb[0].mxu0
    %v1620 = vadd.f32 %v656, %v1619
    %v1621 = vpop.f32.mrb[0].mxu0
    %v1622 = vadd.f32 %v660, %v1621
    %1623 = vmatprep.mubr.bf16.mxu0 %v509
    %1624 = vmatmul.mubr.bf16.gmra.mrb[0].mxu0 %v508
    %v1625 = vpop.f32.mrb[0].mxu0
    %v1626 = vadd.f32 %v656, %v1625
    %v1627 = vpop.f32.mrb[0].mxu0
    %v1628 = vadd.f32 %v660, %v1627
    %v1629 = vpop.f32.mrb[0].mxu0
    %v1630 = vadd.f32 %v656, %v1629
    %v1631 = vpop.f32.mrb[0].mxu0
    %v1632 = vadd.f32 %v660, %v1631
    %1633 = vmatprep.mubr.bf16.mxu0 %v513
    %1634 = vmatmul.mubr.bf16.gmra.mrb[0].mxu0 %v512
    %v1635 = vpop.f32.mrb[0].mxu0
    %v1636 = vadd.f32 %v656, %v1635
    %v1637 = vpop.f32.mrb[0].mxu0
    %v1638 = vadd.f32 %v660, %v1637
    %v1639 = vpop.f32.mrb[0].mxu0
    %v1640 = vadd.f32 %v656, %v1639
    %v1641 = vpop.f32.mrb[0].mxu0
    %v1642 = vadd.f32 %v660, %v1641
    %1643 = vdwg.mxu0
    %1644 = vmatprep.subr.bf16.mxu0 %v1116
    %1645 = vmatpush1.bf16.msra.mxu0 %v1115
    %1646 = vmatprep.subr.bf16.mxu0 %v1120
    %1647 = vmatpush1.bf16.msra.mxu0 %v1119
    %1648 = vmatprep.subr.bf16.mxu0 %v1124
    %1649 = vmatpush1.bf16.msra.mxu0 %v1123
    %1650 = vmatprep.subr.bf16.mxu0 %v1128
    %1651 = vmatpush1.bf16.msra.mxu0 %v1127
    %1652 = vmatprep.subr.bf16.mxu0 %v1132
    %1653 = vmatpush1.bf16.msra.mxu0 %v1131
    %1654 = vmatprep.subr.bf16.mxu0 %v1136
    %1655 = vmatpush1.bf16.msra.mxu0 %v1135
    %1656 = vmatprep.subr.bf16.mxu0 %v1140
    %1657 = vmatpush1.bf16.msra.mxu0 %v1139
    %1658 = vmatprep.subr.bf16.mxu0 %v1144
    %1659 = vmatpush1.bf16.msra.mxu0 %v1143
    %1660 = vmatprep.subr.bf16.mxu0 %v1148
    %1661 = vmatpush1.bf16.msra.mxu0 %v1147
    %1662 = vmatprep.subr.bf16.mxu0 %v1152
    %1663 = vmatpush1.bf16.msra.mxu0 %v1151
    %1664 = vmatprep.subr.bf16.mxu0 %v1156
    %1665 = vmatpush1.bf16.msra.mxu0 %v1155
    %1666 = vmatprep.subr.bf16.mxu0 %v1160
    %1667 = vmatpush1.bf16.msra.mxu0 %v1159
    %1668 = vmatprep.subr.bf16.mxu0 %v1164
    %1669 = vmatpush1.bf16.msra.mxu0 %v1163
    %1670 = vmatprep.subr.bf16.mxu0 %v1168
    %1671 = vmatpush1.bf16.msra.mxu0 %v1167
    %1672 = vmatprep.subr.bf16.mxu0 %v1172
    %1673 = vmatpush1.bf16.msra.mxu0 %v1171
    %1674 = vmatprep.subr.bf16.mxu0 %v1176
    %1675 = vmatpush1.bf16.msra.mxu0 %v1175
    %1676 = vmatprep.mubr.bf16.mxu0 %v487
    %1677 = vmatmul.mubr.bf16.gmra.mrb[0].mxu0 %v486
    %v1678 = vpop.f32.mrb[0].mxu0
    %v1679 = vadd.f32 %v1566, %v1678
    %v1680 = vpop.f32.mrb[0].mxu0
    %v1681 = vadd.f32 %v1568, %v1680
    %v1682 = vpop.f32.mrb[0].mxu0
    %v1683 = vadd.f32 %v1570, %v1682
    %v1684 = vpop.f32.mrb[0].mxu0
    %v1685 = vadd.f32 %v1572, %v1684
    %1686 = vmatprep.mubr.bf16.mxu0 %v491
    %1687 = vmatmul.mubr.bf16.gmra.mrb[0].mxu0 %v490
    %v1688 = vpop.f32.mrb[0].mxu0
    %v1689 = vadd.f32 %v1576, %v1688
    %v1690 = vpop.f32.mrb[0].mxu0
    %v1691 = vadd.f32 %v1578, %v1690
    %v1692 = vpop.f32.mrb[0].mxu0
    %v1693 = vadd.f32 %v1580, %v1692
    %v1694 = vpop.f32.mrb[0].mxu0
    %v1695 = vadd.f32 %v1582, %v1694
    %1696 = vmatprep.mubr.bf16.mxu0 %v495
    %1697 = vmatmul.mubr.bf16.gmra.mrb[0].mxu0 %v494
    %v1698 = vpop.f32.mrb[0].mxu0
    %v1699 = vadd.f32 %v1586, %v1698
    %v1700 = vpop.f32.mrb[0].mxu0
    %v1701 = vadd.f32 %v1588, %v1700
    %v1702 = vpop.f32.mrb[0].mxu0
    %v1703 = vadd.f32 %v1590, %v1702
    %v1704 = vpop.f32.mrb[0].mxu0
    %v1705 = vadd.f32 %v1592, %v1704
    %1706 = vmatprep.mubr.bf16.mxu0 %v499
    %1707 = vmatmul.mubr.bf16.gmra.mrb[0].mxu0 %v498
    %v1708 = vpop.f32.mrb[0].mxu0
    %v1709 = vadd.f32 %v1596, %v1708
    %v1710 = vpop.f32.mrb[0].mxu0
    %v1711 = vadd.f32 %v1598, %v1710
    %v1712 = vpop.f32.mrb[0].mxu0
    %v1713 = vadd.f32 %v1600, %v1712
    %v1714 = vpop.f32.mrb[0].mxu0
    %v1715 = vadd.f32 %v1602, %v1714
    %1716 = vmatprep.mubr.bf16.mxu0 %v503
    %1717 = vmatmul.mubr.bf16.gmra.mrb[0].mxu0 %v502
    %v1718 = vpop.f32.mrb[0].mxu0
    %v1719 = vadd.f32 %v1606, %v1718
    %v1720 = vpop.f32.mrb[0].mxu0
    %v1721 = vadd.f32 %v1608, %v1720
    %v1722 = vpop.f32.mrb[0].mxu0
    %v1723 = vadd.f32 %v1610, %v1722
    %v1724 = vpop.f32.mrb[0].mxu0
    %v1725 = vadd.f32 %v1612, %v1724
    %1726 = vmatprep.mubr.bf16.mxu0 %v507
    %1727 = vmatmul.mubr.bf16.gmra.mrb[0].mxu0 %v506
    %v1728 = vpop.f32.mrb[0].mxu0
    %v1729 = vadd.f32 %v1616, %v1728
    %v1730 = vpop.f32.mrb[0].mxu0
    %v1731 = vadd.f32 %v1618, %v1730
    %v1732 = vpop.f32.mrb[0].mxu0
    %v1733 = vadd.f32 %v1620, %v1732
    %v1734 = vpop.f32.mrb[0].mxu0
    %v1735 = vadd.f32 %v1622, %v1734
    %1736 = vmatprep.mubr.bf16.mxu0 %v511
    %1737 = vmatmul.mubr.bf16.gmra.mrb[0].mxu0 %v510
    %v1738 = vpop.f32.mrb[0].mxu0
    %v1739 = vadd.f32 %v1626, %v1738
    %v1740 = vpop.f32.mrb[0].mxu0
    %v1741 = vadd.f32 %v1628, %v1740
    %v1742 = vpop.f32.mrb[0].mxu0
    %v1743 = vadd.f32 %v1630, %v1742
    %v1744 = vpop.f32.mrb[0].mxu0
    %v1745 = vadd.f32 %v1632, %v1744
    %1746 = vmatprep.mubr.bf16.mxu0 %v515
    %1747 = vmatmul.mubr.bf16.gmra.mrb[0].mxu0 %v514
    %v1748 = vpop.f32.mrb[0].mxu0
    %v1749 = vadd.f32 %v1636, %v1748
    %v1750 = vpop.f32.mrb[0].mxu0
    %v1751 = vadd.f32 %v1638, %v1750
    %v1752 = vpop.f32.mrb[0].mxu0
    %v1753 = vadd.f32 %v1640, %v1752
    %v1754 = vpop.f32.mrb[0].mxu0
    %v1755 = vadd.f32 %v1642, %v1754
    %1756 = vdwg.mxu0
    %v1757 = vmax.f32 %v1453, 0.0
    %v1758 = vmax.f32 %v1455, 0.0
    %v1759 = vmax.f32 %v1679, 0.0
    %v1760 = vmax.f32 %v1681, 0.0
    %v1761 = vmax.f32 %v1457, 0.0
    %v1762 = vmax.f32 %v1459, 0.0
    %v1763 = vmax.f32 %v1683, 0.0
    %v1764 = vmax.f32 %v1685, 0.0
    %v1765 = vmax.f32 %v1463, 0.0
    %v1766 = vmax.f32 %v1465, 0.0
    %v1767 = vmax.f32 %v1689, 0.0
    %v1768 = vmax.f32 %v1691, 0.0
    %v1769 = vmax.f32 %v1467, 0.0
    %v1770 = vmax.f32 %v1469, 0.0
    %v1771 = vmax.f32 %v1693, 0.0
    %v1772 = vmax.f32 %v1695, 0.0
    %v1773 = vmax.f32 %v1473, 0.0
    %v1774 = vmax.f32 %v1475, 0.0
    %v1775 = vmax.f32 %v1699, 0.0
    %v1776 = vmax.f32 %v1701, 0.0
    %v1777 = vmax.f32 %v1477, 0.0
    %v1778 = vmax.f32 %v1479, 0.0
    %v1779 = vmax.f32 %v1703, 0.0
    %v1780 = vmax.f32 %v1705, 0.0
    %v1781 = vmax.f32 %v1483, 0.0
    %v1782 = vmax.f32 %v1485, 0.0
    %v1783 = vmax.f32 %v1709, 0.0
    %v1784 = vmax.f32 %v1711, 0.0
    %v1785 = vmax.f32 %v1487, 0.0
    %v1786 = vmax.f32 %v1489, 0.0
    %v1787 = vmax.f32 %v1713, 0.0
    %v1788 = vmax.f32 %v1715, 0.0
    %v1789 = vmax.f32 %v1493, 0.0
    %v1790 = vmax.f32 %v1495, 0.0
    %v1791 = vmax.f32 %v1719, 0.0
    %v1792 = vmax.f32 %v1721, 0.0
    %v1793 = vmax.f32 %v1497, 0.0
    %v1794 = vmax.f32 %v1499, 0.0
    %v1795 = vmax.f32 %v1723, 0.0
    %v1796 = vmax.f32 %v1725, 0.0
    %v1797 = vmax.f32 %v1503, 0.0
    %v1798 = vmax.f32 %v1505, 0.0
    %v1799 = vmax.f32 %v1729, 0.0
    %v1800 = vmax.f32 %v1731, 0.0
    %v1801 = vmax.f32 %v1507, 0.0
    %v1802 = vmax.f32 %v1509, 0.0
    %v1803 = vmax.f32 %v1733, 0.0
    %v1804 = vmax.f32 %v1735, 0.0
    %v1805 = vmax.f32 %v1513, 0.0
    %v1806 = vmax.f32 %v1515, 0.0
    %v1807 = vmax.f32 %v1739, 0.0
    %v1808 = vmax.f32 %v1741, 0.0
    %v1809 = vmax.f32 %v1517, 0.0
    %v1810 = vmax.f32 %v1519, 0.0
    %v1811 = vmax.f32 %v1743, 0.0
    %v1812 = vmax.f32 %v1745, 0.0
    %v1813 = vmax.f32 %v1523, 0.0
    %v1814 = vmax.f32 %v1525, 0.0
    %v1815 = vmax.f32 %v1749, 0.0
    %v1816 = vmax.f32 %v1751, 0.0
    %v1817 = vmax.f32 %v1527, 0.0
    %v1818 = vmax.f32 %v1529, 0.0
    %v1819 = vmax.f32 %v1753, 0.0
    %v1820 = vmax.f32 %v1755, 0.0
    %v1821 = vld [vmem:[%s7 + $0x8] sm:$0x3]
    %v1822 = vpack.c.bf16 %v1761, %v1757
    %v1823 = vpack.c.bf16 %v1762, %v1758
    %v1824 = vpack.c.bf16 %v1763, %v1759
    %v1825 = vpack.c.bf16 %v1764, %v1760
    %v1826 = vpack.c.bf16 %v1769, %v1765
    %v1827 = vpack.c.bf16 %v1770, %v1766
    %v1828 = vpack.c.bf16 %v1771, %v1767
    %v1829 = vpack.c.bf16 %v1772, %v1768
    %v1830 = vpack.c.bf16 %v1777, %v1773
    %v1831 = vpack.c.bf16 %v1778, %v1774
    %v1832 = vpack.c.bf16 %v1779, %v1775
    %v1833 = vpack.c.bf16 %v1780, %v1776
    %v1834 = vpack.c.bf16 %v1785, %v1781
    %v1835 = vpack.c.bf16 %v1786, %v1782
    %v1836 = vpack.c.bf16 %v1787, %v1783
    %v1837 = vpack.c.bf16 %v1788, %v1784
    %v1838 = vpack.c.bf16 %v1793, %v1789
    %v1839 = vpack.c.bf16 %v1794, %v1790
    %v1840 = vpack.c.bf16 %v1795, %v1791
    %v1841 = vpack.c.bf16 %v1796, %v1792
    %v1842 = vpack.c.bf16 %v1801, %v1797
    %v1843 = vpack.c.bf16 %v1802, %v1798
    %v1844 = vpack.c.bf16 %v1803, %v1799
    %v1845 = vpack.c.bf16 %v1804, %v1800
    %v1846 = vpack.c.bf16 %v1809, %v1805
    %v1847 = vpack.c.bf16 %v1810, %v1806
    %v1848 = vpack.c.bf16 %v1811, %v1807
    %v1849 = vpack.c.bf16 %v1812, %v1808
    %v1850 = vpack.c.bf16 %v1817, %v1813
    %v1851 = vpack.c.bf16 %v1818, %v1814
    %v1852 = vpack.c.bf16 %v1819, %v1815
    %v1853 = vpack.c.bf16 %v1820, %v1816
    %v1854 = vld [vmem:[#allocation6] sm:$0xff]
    %v1855 = vld [vmem:[#allocation6 + $0x8] sm:$0xff]
    %v1856 = vld [vmem:[#allocation6 + $0x10] sm:$0xff]
    %v1857 = vld [vmem:[#allocation6 + $0x18] sm:$0xff]
    %v1858 = vld [vmem:[#allocation6 + $0x20] sm:$0xff]
    %v1859 = vld [vmem:[#allocation6 + $0x28] sm:$0xff]
    %v1860 = vld [vmem:[#allocation6 + $0x30] sm:$0xff]
    %v1861 = vld [vmem:[#allocation6 + $0x38] sm:$0xff]
    %v1862 = vld [vmem:[#allocation6 + $0x40] sm:$0xff]
    %v1863 = vld [vmem:[#allocation6 + $0x48] sm:$0xff]
    %v1864 = vld [vmem:[#allocation6 + $0x50] sm:$0xff]
    %v1865 = vld [vmem:[#allocation6 + $0x58] sm:$0xff]
    %v1866 = vld [vmem:[#allocation6 + $0x60] sm:$0xff]
    %v1867 = vld [vmem:[#allocation6 + $0x68] sm:$0xff]
    %v1868 = vld [vmem:[#allocation6 + $0x70] sm:$0xff]
    %v1869 = vld [vmem:[#allocation6 + $0x78] sm:$0xff]
    %v1870 = vld [vmem:[#allocation6 + $0x80] sm:$0xff]
    %v1871 = vld [vmem:[#allocation6 + $0x88] sm:$0xff]
    %v1872 = vld [vmem:[#allocation6 + $0x90] sm:$0xff]
    %v1873 = vld [vmem:[#allocation6 + $0x98] sm:$0xff]
    %v1874 = vld [vmem:[#allocation6 + $0xa0] sm:$0xff]
    %v1875 = vld [vmem:[#allocation6 + $0xa8] sm:$0xff]
    %v1876 = vld [vmem:[#allocation6 + $0xb0] sm:$0xff]
    %v1877 = vld [vmem:[#allocation6 + $0xb8] sm:$0xff]
    %v1878 = vld [vmem:[#allocation6 + $0xc0] sm:$0xff]
    %v1879 = vld [vmem:[#allocation6 + $0xc8] sm:$0xff]
    %v1880 = vld [vmem:[#allocation6 + $0xd0] sm:$0xff]
    %v1881 = vld [vmem:[#allocation6 + $0xd8] sm:$0xff]
    %v1882 = vld [vmem:[#allocation6 + $0xe0] sm:$0xff]
    %v1883 = vld [vmem:[#allocation6 + $0xe8] sm:$0xff]
    %v1884 = vld [vmem:[#allocation6 + $0xf0] sm:$0xff]
    %v1885 = vld [vmem:[#allocation6 + $0xf8] sm:$0xff]
    %v1886 = vld [vmem:[#allocation6 + $0x100] sm:$0xff]
    %v1887 = vld [vmem:[#allocation6 + $0x108] sm:$0xff]
    %v1888 = vld [vmem:[#allocation6 + $0x110] sm:$0xff]
    %v1889 = vld [vmem:[#allocation6 + $0x118] sm:$0xff]
    %v1890 = vld [vmem:[#allocation6 + $0x120] sm:$0xff]
    %v1891 = vld [vmem:[#allocation6 + $0x128] sm:$0xff]
    %v1892 = vld [vmem:[#allocation6 + $0x130] sm:$0xff]
    %v1893 = vld [vmem:[#allocation6 + $0x138] sm:$0xff]
    %v1894 = vld [vmem:[#allocation6 + $0x140] sm:$0xff]
    %v1895 = vld [vmem:[#allocation6 + $0x148] sm:$0xff]
    %v1896 = vld [vmem:[#allocation6 + $0x150] sm:$0xff]
    %v1897 = vld [vmem:[#allocation6 + $0x158] sm:$0xff]
    %v1898 = vld [vmem:[#allocation6 + $0x160] sm:$0xff]
    %v1899 = vld [vmem:[#allocation6 + $0x168] sm:$0xff]
    %v1900 = vld [vmem:[#allocation6 + $0x170] sm:$0xff]
    %v1901 = vld [vmem:[#allocation6 + $0x178] sm:$0xff]
    %v1902 = vld [vmem:[#allocation6 + $0x180] sm:$0xff]
    %v1903 = vld [vmem:[#allocation6 + $0x188] sm:$0xff]
    %v1904 = vld [vmem:[#allocation6 + $0x190] sm:$0xff]
    %v1905 = vld [vmem:[#allocation6 + $0x198] sm:$0xff]
    %v1906 = vld [vmem:[#allocation6 + $0x1a0] sm:$0xff]
    %v1907 = vld [vmem:[#allocation6 + $0x1a8] sm:$0xff]
    %v1908 = vld [vmem:[#allocation6 + $0x1b0] sm:$0xff]
    %v1909 = vld [vmem:[#allocation6 + $0x1b8] sm:$0xff]
    %v1910 = vld [vmem:[#allocation6 + $0x1c0] sm:$0xff]
    %v1911 = vld [vmem:[#allocation6 + $0x1c8] sm:$0xff]
    %v1912 = vld [vmem:[#allocation6 + $0x1d0] sm:$0xff]
    %v1913 = vld [vmem:[#allocation6 + $0x1d8] sm:$0xff]
    %v1914 = vld [vmem:[#allocation6 + $0x1e0] sm:$0xff]
    %v1915 = vld [vmem:[#allocation6 + $0x1e8] sm:$0xff]
    %v1916 = vld [vmem:[#allocation6 + $0x1f0] sm:$0xff]
    %v1917 = vld [vmem:[#allocation6 + $0x1f8] sm:$0xff]
    %v1919 = vlaneseq
    %v1920 = vshrl.u32 %v1919, 7
    %v1921 = vsub.s32 0, %v1920
    %v1922 = vrot.slane %v1821, %v1921
    %v1923 = vlaneseq
    %v1924 = vshrl.u32 %v1923, 7
    %v1925 = vsub.s32 1, %v1924
    %v1926 = vrot.slane %v1821, %v1925
    %v1993 = vunpack.c.l.b16 %v1854
    %v1994 = vunpack.c.h.b16 %v1854
    %v1995 = vunpack.c.l.b16 %v1855
    %v1996 = vunpack.c.h.b16 %v1855
    %v1997 = vunpack.c.l.b16 %v1856
    %v1998 = vunpack.c.h.b16 %v1856
    %v1999 = vunpack.c.l.b16 %v1857
    %v2000 = vunpack.c.h.b16 %v1857
    %v2001 = vunpack.c.l.b16 %v1858
    %v2002 = vunpack.c.h.b16 %v1858
    %v2003 = vunpack.c.l.b16 %v1859
    %v2004 = vunpack.c.h.b16 %v1859
    %v2005 = vunpack.c.l.b16 %v1860
    %v2006 = vunpack.c.h.b16 %v1860
    %v2007 = vunpack.c.l.b16 %v1861
    %v2008 = vunpack.c.h.b16 %v1861
    %v2009 = vunpack.c.l.b16 %v1862
    %v2010 = vunpack.c.h.b16 %v1862
    %v2011 = vunpack.c.l.b16 %v1863
    %v2012 = vunpack.c.h.b16 %v1863
    %v2013 = vunpack.c.l.b16 %v1864
    %v2014 = vunpack.c.h.b16 %v1864
    %v2015 = vunpack.c.l.b16 %v1865
    %v2016 = vunpack.c.h.b16 %v1865
    %v2017 = vunpack.c.l.b16 %v1866
    %v2018 = vunpack.c.h.b16 %v1866
    %v2019 = vunpack.c.l.b16 %v1867
    %v2020 = vunpack.c.h.b16 %v1867
    %v2021 = vunpack.c.l.b16 %v1868
    %v2022 = vunpack.c.h.b16 %v1868
    %v2023 = vunpack.c.l.b16 %v1869
    %v2024 = vunpack.c.h.b16 %v1869
    %v2025 = vunpack.c.l.b16 %v1870
    %v2026 = vunpack.c.h.b16 %v1870
    %v2027 = vunpack.c.l.b16 %v1871
    %v2028 = vunpack.c.h.b16 %v1871
    %v2029 = vunpack.c.l.b16 %v1872
    %v2030 = vunpack.c.h.b16 %v1872
    %v2031 = vunpack.c.l.b16 %v1873
    %v2032 = vunpack.c.h.b16 %v1873
    %v2033 = vunpack.c.l.b16 %v1874
    %v2034 = vunpack.c.h.b16 %v1874
    %v2035 = vunpack.c.l.b16 %v1875
    %v2036 = vunpack.c.h.b16 %v1875
    %v2037 = vunpack.c.l.b16 %v1876
    %v2038 = vunpack.c.h.b16 %v1876
    %v2039 = vunpack.c.l.b16 %v1877
    %v2040 = vunpack.c.h.b16 %v1877
    %v2041 = vunpack.c.l.b16 %v1878
    %v2042 = vunpack.c.h.b16 %v1878
    %v2043 = vunpack.c.l.b16 %v1879
    %v2044 = vunpack.c.h.b16 %v1879
    %v2045 = vunpack.c.l.b16 %v1880
    %v2046 = vunpack.c.h.b16 %v1880
    %v2047 = vunpack.c.l.b16 %v1881
    %v2048 = vunpack.c.h.b16 %v1881
    %v2049 = vunpack.c.l.b16 %v1882
    %v2050 = vunpack.c.h.b16 %v1882
    %v2051 = vunpack.c.l.b16 %v1883
    %v2052 = vunpack.c.h.b16 %v1883
    %v2053 = vunpack.c.l.b16 %v1884
    %v2054 = vunpack.c.h.b16 %v1884
    %v2055 = vunpack.c.l.b16 %v1885
    %v2056 = vunpack.c.h.b16 %v1885
    %v2057 = vunpack.c.l.b16 %v1886
    %v2058 = vunpack.c.h.b16 %v1886
    %v2059 = vunpack.c.l.b16 %v1887
    %v2060 = vunpack.c.h.b16 %v1887
    %v2061 = vunpack.c.l.b16 %v1888
    %v2062 = vunpack.c.h.b16 %v1888
    %v2063 = vunpack.c.l.b16 %v1889
    %v2064 = vunpack.c.h.b16 %v1889
    %v2065 = vunpack.c.l.b16 %v1890
    %v2066 = vunpack.c.h.b16 %v1890
    %v2067 = vunpack.c.l.b16 %v1891
    %v2068 = vunpack.c.h.b16 %v1891
    %v2069 = vunpack.c.l.b16 %v1892
    %v2070 = vunpack.c.h.b16 %v1892
    %v2071 = vunpack.c.l.b16 %v1893
    %v2072 = vunpack.c.h.b16 %v1893
    %v2073 = vunpack.c.l.b16 %v1894
    %v2074 = vunpack.c.h.b16 %v1894
    %v2075 = vunpack.c.l.b16 %v1895
    %v2076 = vunpack.c.h.b16 %v1895
    %v2077 = vunpack.c.l.b16 %v1896
    %v2078 = vunpack.c.h.b16 %v1896
    %v2079 = vunpack.c.l.b16 %v1897
    %v2080 = vunpack.c.h.b16 %v1897
    %v2081 = vunpack.c.l.b16 %v1898
    %v2082 = vunpack.c.h.b16 %v1898
    %v2083 = vunpack.c.l.b16 %v1899
    %v2084 = vunpack.c.h.b16 %v1899
    %v2085 = vunpack.c.l.b16 %v1900
    %v2086 = vunpack.c.h.b16 %v1900
    %v2087 = vunpack.c.l.b16 %v1901
    %v2088 = vunpack.c.h.b16 %v1901
    %v2089 = vunpack.c.l.b16 %v1902
    %v2090 = vunpack.c.h.b16 %v1902
    %v2091 = vunpack.c.l.b16 %v1903
    %v2092 = vunpack.c.h.b16 %v1903
    %v2093 = vunpack.c.l.b16 %v1904
    %v2094 = vunpack.c.h.b16 %v1904
    %v2095 = vunpack.c.l.b16 %v1905
    %v2096 = vunpack.c.h.b16 %v1905
    %v2097 = vunpack.c.l.b16 %v1906
    %v2098 = vunpack.c.h.b16 %v1906
    %v2099 = vunpack.c.l.b16 %v1907
    %v2100 = vunpack.c.h.b16 %v1907
    %v2101 = vunpack.c.l.b16 %v1908
    %v2102 = vunpack.c.h.b16 %v1908
    %v2103 = vunpack.c.l.b16 %v1909
    %v2104 = vunpack.c.h.b16 %v1909
    %v2105 = vunpack.c.l.b16 %v1910
    %v2106 = vunpack.c.h.b16 %v1910
    %v2107 = vunpack.c.l.b16 %v1911
    %v2108 = vunpack.c.h.b16 %v1911
    %v2109 = vunpack.c.l.b16 %v1912
    %v2110 = vunpack.c.h.b16 %v1912
    %v2111 = vunpack.c.l.b16 %v1913
    %v2112 = vunpack.c.h.b16 %v1913
    %v2113 = vunpack.c.l.b16 %v1914
    %v2114 = vunpack.c.h.b16 %v1914
    %v2115 = vunpack.c.l.b16 %v1915
    %v2116 = vunpack.c.h.b16 %v1915
    %v2117 = vunpack.c.l.b16 %v1916
    %v2118 = vunpack.c.h.b16 %v1916
    %v2119 = vunpack.c.l.b16 %v1917
    %v2120 = vunpack.c.h.b16 %v1917
    %v2121 = vpack.c.b16 %v1995, %v1993
    %v2122 = vpack.c.b16 %v1996, %v1994
    %v2123 = vpack.c.b16 %v1999, %v1997
    %v2124 = vpack.c.b16 %v2000, %v1998
    %v2125 = vpack.c.b16 %v2003, %v2001
    %v2126 = vpack.c.b16 %v2004, %v2002
    %v2127 = vpack.c.b16 %v2007, %v2005
    %v2128 = vpack.c.b16 %v2008, %v2006
    %v2129 = vpack.c.b16 %v2011, %v2009
    %v2130 = vpack.c.b16 %v2012, %v2010
    %v2131 = vpack.c.b16 %v2015, %v2013
    %v2132 = vpack.c.b16 %v2016, %v2014
    %v2133 = vpack.c.b16 %v2019, %v2017
    %v2134 = vpack.c.b16 %v2020, %v2018
    %v2135 = vpack.c.b16 %v2023, %v2021
    %v2136 = vpack.c.b16 %v2024, %v2022
    %v2137 = vpack.c.b16 %v2027, %v2025
    %v2138 = vpack.c.b16 %v2028, %v2026
    %v2139 = vpack.c.b16 %v2031, %v2029
    %v2140 = vpack.c.b16 %v2032, %v2030
    %v2141 = vpack.c.b16 %v2035, %v2033
    %v2142 = vpack.c.b16 %v2036, %v2034
    %v2143 = vpack.c.b16 %v2039, %v2037
    %v2144 = vpack.c.b16 %v2040, %v2038
    %v2145 = vpack.c.b16 %v2043, %v2041
    %v2146 = vpack.c.b16 %v2044, %v2042
    %v2147 = vpack.c.b16 %v2047, %v2045
    %v2148 = vpack.c.b16 %v2048, %v2046
    %v2149 = vpack.c.b16 %v2051, %v2049
    %v2150 = vpack.c.b16 %v2052, %v2050
    %v2151 = vpack.c.b16 %v2055, %v2053
    %v2152 = vpack.c.b16 %v2056, %v2054
    %v2153 = vpack.c.b16 %v2059, %v2057
    %v2154 = vpack.c.b16 %v2060, %v2058
    %v2155 = vpack.c.b16 %v2063, %v2061
    %v2156 = vpack.c.b16 %v2064, %v2062
    %v2157 = vpack.c.b16 %v2067, %v2065
    %v2158 = vpack.c.b16 %v2068, %v2066
    %v2159 = vpack.c.b16 %v2071, %v2069
    %v2160 = vpack.c.b16 %v2072, %v2070
    %v2161 = vpack.c.b16 %v2075, %v2073
    %v2162 = vpack.c.b16 %v2076, %v2074
    %v2163 = vpack.c.b16 %v2079, %v2077
    %v2164 = vpack.c.b16 %v2080, %v2078
    %v2165 = vpack.c.b16 %v2083, %v2081
    %v2166 = vpack.c.b16 %v2084, %v2082
    %v2167 = vpack.c.b16 %v2087, %v2085
    %v2168 = vpack.c.b16 %v2088, %v2086
    %v2169 = vpack.c.b16 %v2091, %v2089
    %v2170 = vpack.c.b16 %v2092, %v2090
    %v2171 = vpack.c.b16 %v2095, %v2093
    %v2172 = vpack.c.b16 %v2096, %v2094
    %v2173 = vpack.c.b16 %v2099, %v2097
    %v2174 = vpack.c.b16 %v2100, %v2098
    %v2175 = vpack.c.b16 %v2103, %v2101
    %v2176 = vpack.c.b16 %v2104, %v2102
    %v2177 = vpack.c.b16 %v2107, %v2105
    %v2178 = vpack.c.b16 %v2108, %v2106
    %v2179 = vpack.c.b16 %v2111, %v2109
    %v2180 = vpack.c.b16 %v2112, %v2110
    %v2181 = vpack.c.b16 %v2115, %v2113
    %v2182 = vpack.c.b16 %v2116, %v2114
    %v2183 = vpack.c.b16 %v2119, %v2117
    %v2184 = vpack.c.b16 %v2120, %v2118
    %2249 = vmatprep.subr.bf16.mxu0 %v2122
    %2250 = vmatpush1.bf16.msra.mxu0 %v2121
    %2251 = vmatprep.subr.bf16.mxu0 %v2124
    %2252 = vmatpush1.bf16.msra.mxu0 %v2123
    %2253 = vmatprep.subr.bf16.mxu0 %v2126
    %2254 = vmatpush1.bf16.msra.mxu0 %v2125
    %2255 = vmatprep.subr.bf16.mxu0 %v2128
    %2256 = vmatpush1.bf16.msra.mxu0 %v2127
    %2257 = vmatprep.subr.bf16.mxu0 %v2130
    %2258 = vmatpush1.bf16.msra.mxu0 %v2129
    %2259 = vmatprep.subr.bf16.mxu0 %v2132
    %2260 = vmatpush1.bf16.msra.mxu0 %v2131
    %2261 = vmatprep.subr.bf16.mxu0 %v2134
    %2262 = vmatpush1.bf16.msra.mxu0 %v2133
    %2263 = vmatprep.subr.bf16.mxu0 %v2136
    %2264 = vmatpush1.bf16.msra.mxu0 %v2135
    %2265 = vmatprep.subr.bf16.mxu0 %v2138
    %2266 = vmatpush1.bf16.msra.mxu0 %v2137
    %2267 = vmatprep.subr.bf16.mxu0 %v2140
    %2268 = vmatpush1.bf16.msra.mxu0 %v2139
    %2269 = vmatprep.subr.bf16.mxu0 %v2142
    %2270 = vmatpush1.bf16.msra.mxu0 %v2141
    %2271 = vmatprep.subr.bf16.mxu0 %v2144
    %2272 = vmatpush1.bf16.msra.mxu0 %v2143
    %2273 = vmatprep.subr.bf16.mxu0 %v2146
    %2274 = vmatpush1.bf16.msra.mxu0 %v2145
    %2275 = vmatprep.subr.bf16.mxu0 %v2148
    %2276 = vmatpush1.bf16.msra.mxu0 %v2147
    %2277 = vmatprep.subr.bf16.mxu0 %v2150
    %2278 = vmatpush1.bf16.msra.mxu0 %v2149
    %2279 = vmatprep.subr.bf16.mxu0 %v2152
    %2280 = vmatpush1.bf16.msra.mxu0 %v2151
    %2281 = vmatprep.mubr.bf16.mxu0 %v1823
    %2282 = vmatmul.mubr.bf16.gmra.mrb[0].mxu0 %v1822
    %v2283 = vpop.f32.mrb[0].mxu0
    %v2284 = vadd.f32 %v1922, %v2283
    %v2285 = vpop.f32.mrb[0].mxu0
    %v2286 = vadd.f32 %v1926, %v2285
    %v2287 = vpop.f32.mrb[0].mxu0
    %v2288 = vadd.f32 %v1922, %v2287
    %v2289 = vpop.f32.mrb[0].mxu0
    %v2290 = vadd.f32 %v1926, %v2289
    %2291 = vmatprep.mubr.bf16.mxu0 %v1827
    %2292 = vmatmul.mubr.bf16.gmra.mrb[0].mxu0 %v1826
    %v2293 = vpop.f32.mrb[0].mxu0
    %v2294 = vadd.f32 %v1922, %v2293
    %v2295 = vpop.f32.mrb[0].mxu0
    %v2296 = vadd.f32 %v1926, %v2295
    %v2297 = vpop.f32.mrb[0].mxu0
    %v2298 = vadd.f32 %v1922, %v2297
    %v2299 = vpop.f32.mrb[0].mxu0
    %v2300 = vadd.f32 %v1926, %v2299
    %2301 = vmatprep.mubr.bf16.mxu0 %v1831
    %2302 = vmatmul.mubr.bf16.gmra.mrb[0].mxu0 %v1830
    %v2303 = vpop.f32.mrb[0].mxu0
    %v2304 = vadd.f32 %v1922, %v2303
    %v2305 = vpop.f32.mrb[0].mxu0
    %v2306 = vadd.f32 %v1926, %v2305
    %v2307 = vpop.f32.mrb[0].mxu0
    %v2308 = vadd.f32 %v1922, %v2307
    %v2309 = vpop.f32.mrb[0].mxu0
    %v2310 = vadd.f32 %v1926, %v2309
    %2311 = vmatprep.mubr.bf16.mxu0 %v1835
    %2312 = vmatmul.mubr.bf16.gmra.mrb[0].mxu0 %v1834
    %v2313 = vpop.f32.mrb[0].mxu0
    %v2314 = vadd.f32 %v1922, %v2313
    %v2315 = vpop.f32.mrb[0].mxu0
    %v2316 = vadd.f32 %v1926, %v2315
    %v2317 = vpop.f32.mrb[0].mxu0
    %v2318 = vadd.f32 %v1922, %v2317
    %v2319 = vpop.f32.mrb[0].mxu0
    %v2320 = vadd.f32 %v1926, %v2319
    %2321 = vmatprep.mubr.bf16.mxu0 %v1839
    %2322 = vmatmul.mubr.bf16.gmra.mrb[0].mxu0 %v1838
    %v2323 = vpop.f32.mrb[0].mxu0
    %v2324 = vadd.f32 %v1922, %v2323
    %v2325 = vpop.f32.mrb[0].mxu0
    %v2326 = vadd.f32 %v1926, %v2325
    %v2327 = vpop.f32.mrb[0].mxu0
    %v2328 = vadd.f32 %v1922, %v2327
    %v2329 = vpop.f32.mrb[0].mxu0
    %v2330 = vadd.f32 %v1926, %v2329
    %2331 = vmatprep.mubr.bf16.mxu0 %v1843
    %2332 = vmatmul.mubr.bf16.gmra.mrb[0].mxu0 %v1842
    %v2333 = vpop.f32.mrb[0].mxu0
    %v2334 = vadd.f32 %v1922, %v2333
    %v2335 = vpop.f32.mrb[0].mxu0
    %v2336 = vadd.f32 %v1926, %v2335
    %v2337 = vpop.f32.mrb[0].mxu0
    %v2338 = vadd.f32 %v1922, %v2337
    %v2339 = vpop.f32.mrb[0].mxu0
    %v2340 = vadd.f32 %v1926, %v2339
    %2341 = vmatprep.mubr.bf16.mxu0 %v1847
    %2342 = vmatmul.mubr.bf16.gmra.mrb[0].mxu0 %v1846
    %v2343 = vpop.f32.mrb[0].mxu0
    %v2344 = vadd.f32 %v1922, %v2343
    %v2345 = vpop.f32.mrb[0].mxu0
    %v2346 = vadd.f32 %v1926, %v2345
    %v2347 = vpop.f32.mrb[0].mxu0
    %v2348 = vadd.f32 %v1922, %v2347
    %v2349 = vpop.f32.mrb[0].mxu0
    %v2350 = vadd.f32 %v1926, %v2349
    %2351 = vmatprep.mubr.bf16.mxu0 %v1851
    %2352 = vmatmul.mubr.bf16.gmra.mrb[0].mxu0 %v1850
    %v2353 = vpop.f32.mrb[0].mxu0
    %v2354 = vadd.f32 %v1922, %v2353
    %v2355 = vpop.f32.mrb[0].mxu0
    %v2356 = vadd.f32 %v1926, %v2355
    %v2357 = vpop.f32.mrb[0].mxu0
    %v2358 = vadd.f32 %v1922, %v2357
    %v2359 = vpop.f32.mrb[0].mxu0
    %v2360 = vadd.f32 %v1926, %v2359
    %2361 = vdwg.mxu0
    %2362 = vmatprep.subr.bf16.mxu0 %v2154
    %2363 = vmatpush1.bf16.msra.mxu0 %v2153
    %2364 = vmatprep.subr.bf16.mxu0 %v2156
    %2365 = vmatpush1.bf16.msra.mxu0 %v2155
    %2366 = vmatprep.subr.bf16.mxu0 %v2158
    %2367 = vmatpush1.bf16.msra.mxu0 %v2157
    %2368 = vmatprep.subr.bf16.mxu0 %v2160
    %2369 = vmatpush1.bf16.msra.mxu0 %v2159
    %2370 = vmatprep.subr.bf16.mxu0 %v2162
    %2371 = vmatpush1.bf16.msra.mxu0 %v2161
    %2372 = vmatprep.subr.bf16.mxu0 %v2164
    %2373 = vmatpush1.bf16.msra.mxu0 %v2163
    %2374 = vmatprep.subr.bf16.mxu0 %v2166
    %2375 = vmatpush1.bf16.msra.mxu0 %v2165
    %2376 = vmatprep.subr.bf16.mxu0 %v2168
    %2377 = vmatpush1.bf16.msra.mxu0 %v2167
    %2378 = vmatprep.subr.bf16.mxu0 %v2170
    %2379 = vmatpush1.bf16.msra.mxu0 %v2169
    %2380 = vmatprep.subr.bf16.mxu0 %v2172
    %2381 = vmatpush1.bf16.msra.mxu0 %v2171
    %2382 = vmatprep.subr.bf16.mxu0 %v2174
    %2383 = vmatpush1.bf16.msra.mxu0 %v2173
    %2384 = vmatprep.subr.bf16.mxu0 %v2176
    %2385 = vmatpush1.bf16.msra.mxu0 %v2175
    %2386 = vmatprep.subr.bf16.mxu0 %v2178
    %2387 = vmatpush1.bf16.msra.mxu0 %v2177
    %2388 = vmatprep.subr.bf16.mxu0 %v2180
    %2389 = vmatpush1.bf16.msra.mxu0 %v2179
    %2390 = vmatprep.subr.bf16.mxu0 %v2182
    %2391 = vmatpush1.bf16.msra.mxu0 %v2181
    %2392 = vmatprep.subr.bf16.mxu0 %v2184
    %2393 = vmatpush1.bf16.msra.mxu0 %v2183
    %2394 = vmatprep.mubr.bf16.mxu0 %v1825
    %2395 = vmatmul.mubr.bf16.gmra.mrb[0].mxu0 %v1824
    %v2396 = vpop.f32.mrb[0].mxu0
    %v2397 = vadd.f32 %v2284, %v2396
    %v2398 = vpop.f32.mrb[0].mxu0
    %v2399 = vadd.f32 %v2286, %v2398
    %v2400 = vpop.f32.mrb[0].mxu0
    %v2401 = vadd.f32 %v2288, %v2400
    %v2402 = vpop.f32.mrb[0].mxu0
    %v2403 = vadd.f32 %v2290, %v2402
    %2404 = vmatprep.mubr.bf16.mxu0 %v1829
    %2405 = vmatmul.mubr.bf16.gmra.mrb[0].mxu0 %v1828
    %v2406 = vpop.f32.mrb[0].mxu0
    %v2407 = vadd.f32 %v2294, %v2406
    %v2408 = vpop.f32.mrb[0].mxu0
    %v2409 = vadd.f32 %v2296, %v2408
    %v2410 = vpop.f32.mrb[0].mxu0
    %v2411 = vadd.f32 %v2298, %v2410
    %v2412 = vpop.f32.mrb[0].mxu0
    %v2413 = vadd.f32 %v2300, %v2412
    %2414 = vmatprep.mubr.bf16.mxu0 %v1833
    %2415 = vmatmul.mubr.bf16.gmra.mrb[0].mxu0 %v1832
    %v2416 = vpop.f32.mrb[0].mxu0
    %v2417 = vadd.f32 %v2304, %v2416
    %v2418 = vpop.f32.mrb[0].mxu0
    %v2419 = vadd.f32 %v2306, %v2418
    %v2420 = vpop.f32.mrb[0].mxu0
    %v2421 = vadd.f32 %v2308, %v2420
    %v2422 = vpop.f32.mrb[0].mxu0
    %v2423 = vadd.f32 %v2310, %v2422
    %2424 = vmatprep.mubr.bf16.mxu0 %v1837
    %2425 = vmatmul.mubr.bf16.gmra.mrb[0].mxu0 %v1836
    %v2426 = vpop.f32.mrb[0].mxu0
    %v2427 = vadd.f32 %v2314, %v2426
    %v2428 = vpop.f32.mrb[0].mxu0
    %v2429 = vadd.f32 %v2316, %v2428
    %v2430 = vpop.f32.mrb[0].mxu0
    %v2431 = vadd.f32 %v2318, %v2430
    %v2432 = vpop.f32.mrb[0].mxu0
    %v2433 = vadd.f32 %v2320, %v2432
    %2434 = vmatprep.mubr.bf16.mxu0 %v1841
    %2435 = vmatmul.mubr.bf16.gmra.mrb[0].mxu0 %v1840
    %v2436 = vpop.f32.mrb[0].mxu0
    %v2437 = vadd.f32 %v2324, %v2436
    %v2438 = vpop.f32.mrb[0].mxu0
    %v2439 = vadd.f32 %v2326, %v2438
    %v2440 = vpop.f32.mrb[0].mxu0
    %v2441 = vadd.f32 %v2328, %v2440
    %v2442 = vpop.f32.mrb[0].mxu0
    %v2443 = vadd.f32 %v2330, %v2442
    %2444 = vmatprep.mubr.bf16.mxu0 %v1845
    %2445 = vmatmul.mubr.bf16.gmra.mrb[0].mxu0 %v1844
    %v2446 = vpop.f32.mrb[0].mxu0
    %v2447 = vadd.f32 %v2334, %v2446
    %v2448 = vpop.f32.mrb[0].mxu0
    %v2449 = vadd.f32 %v2336, %v2448
    %v2450 = vpop.f32.mrb[0].mxu0
    %v2451 = vadd.f32 %v2338, %v2450
    %v2452 = vpop.f32.mrb[0].mxu0
    %v2453 = vadd.f32 %v2340, %v2452
    %2454 = vmatprep.mubr.bf16.mxu0 %v1849
    %2455 = vmatmul.mubr.bf16.gmra.mrb[0].mxu0 %v1848
    %v2456 = vpop.f32.mrb[0].mxu0
    %v2457 = vadd.f32 %v2344, %v2456
    %v2458 = vpop.f32.mrb[0].mxu0
    %v2459 = vadd.f32 %v2346, %v2458
    %v2460 = vpop.f32.mrb[0].mxu0
    %v2461 = vadd.f32 %v2348, %v2460
    %v2462 = vpop.f32.mrb[0].mxu0
    %v2463 = vadd.f32 %v2350, %v2462
    %2464 = vmatprep.mubr.bf16.mxu0 %v1853
    %2465 = vmatmul.mubr.bf16.gmra.mrb[0].mxu0 %v1852
    %v2466 = vpop.f32.mrb[0].mxu0
    %v2467 = vadd.f32 %v2354, %v2466
    %v2468 = vpop.f32.mrb[0].mxu0
    %v2469 = vadd.f32 %v2356, %v2468
    %v2470 = vpop.f32.mrb[0].mxu0
    %v2471 = vadd.f32 %v2358, %v2470
    %v2472 = vpop.f32.mrb[0].mxu0
    %v2473 = vadd.f32 %v2360, %v2472
    %2474 = vdwg.mxu0
    %v2475 = vmax.f32 %v2397, 0.0
    %v2476 = vmax.f32 %v2399, 0.0
    %v2477 = vmax.f32 %v2401, 0.0
    %v2478 = vmax.f32 %v2403, 0.0
    %v2479 = vmax.f32 %v2407, 0.0
    %v2480 = vmax.f32 %v2409, 0.0
    %v2481 = vmax.f32 %v2411, 0.0
    %v2482 = vmax.f32 %v2413, 0.0
    %v2483 = vmax.f32 %v2417, 0.0
    %v2484 = vmax.f32 %v2419, 0.0
    %v2485 = vmax.f32 %v2421, 0.0
    %v2486 = vmax.f32 %v2423, 0.0
    %v2487 = vmax.f32 %v2427, 0.0
    %v2488 = vmax.f32 %v2429, 0.0
    %v2489 = vmax.f32 %v2431, 0.0
    %v2490 = vmax.f32 %v2433, 0.0
    %v2491 = vmax.f32 %v2437, 0.0
    %v2492 = vmax.f32 %v2439, 0.0
    %v2493 = vmax.f32 %v2441, 0.0
    %v2494 = vmax.f32 %v2443, 0.0
    %v2495 = vmax.f32 %v2447, 0.0
    %v2496 = vmax.f32 %v2449, 0.0
    %v2497 = vmax.f32 %v2451, 0.0
    %v2498 = vmax.f32 %v2453, 0.0
    %v2499 = vmax.f32 %v2457, 0.0
    %v2500 = vmax.f32 %v2459, 0.0
    %v2501 = vmax.f32 %v2461, 0.0
    %v2502 = vmax.f32 %v2463, 0.0
    %v2503 = vmax.f32 %v2467, 0.0
    %v2504 = vmax.f32 %v2469, 0.0
    %v2505 = vmax.f32 %v2471, 0.0
    %v2506 = vmax.f32 %v2473, 0.0
    %v2507 = vld [vmem:[%s7 + $0xa] sm:$0x3]
    %v2508 = vpack.c.bf16 %v2477, %v2475
    %v2509 = vpack.c.bf16 %v2478, %v2476
    %v2510 = vpack.c.bf16 %v2481, %v2479
    %v2511 = vpack.c.bf16 %v2482, %v2480
    %v2512 = vpack.c.bf16 %v2485, %v2483
    %v2513 = vpack.c.bf16 %v2486, %v2484
    %v2514 = vpack.c.bf16 %v2489, %v2487
    %v2515 = vpack.c.bf16 %v2490, %v2488
    %v2516 = vpack.c.bf16 %v2493, %v2491
    %v2517 = vpack.c.bf16 %v2494, %v2492
    %v2518 = vpack.c.bf16 %v2497, %v2495
    %v2519 = vpack.c.bf16 %v2498, %v2496
    %v2520 = vpack.c.bf16 %v2501, %v2499
    %v2521 = vpack.c.bf16 %v2502, %v2500
    %v2522 = vpack.c.bf16 %v2505, %v2503
    %v2523 = vpack.c.bf16 %v2506, %v2504
    %v2524 = vld [vmem:[#allocation7] sm:$0xff]
    %v2525 = vld [vmem:[#allocation7 + $0x8] sm:$0xff]
    %v2526 = vld [vmem:[#allocation7 + $0x10] sm:$0xff]
    %v2527 = vld [vmem:[#allocation7 + $0x18] sm:$0xff]
    %v2528 = vld [vmem:[#allocation7 + $0x20] sm:$0xff]
    %v2529 = vld [vmem:[#allocation7 + $0x28] sm:$0xff]
    %v2530 = vld [vmem:[#allocation7 + $0x30] sm:$0xff]
    %v2531 = vld [vmem:[#allocation7 + $0x38] sm:$0xff]
    %v2532 = vld [vmem:[#allocation7 + $0x40] sm:$0xff]
    %v2533 = vld [vmem:[#allocation7 + $0x48] sm:$0xff]
    %v2534 = vld [vmem:[#allocation7 + $0x50] sm:$0xff]
    %v2535 = vld [vmem:[#allocation7 + $0x58] sm:$0xff]
    %v2536 = vld [vmem:[#allocation7 + $0x60] sm:$0xff]
    %v2537 = vld [vmem:[#allocation7 + $0x68] sm:$0xff]
    %v2538 = vld [vmem:[#allocation7 + $0x70] sm:$0xff]
    %v2539 = vld [vmem:[#allocation7 + $0x78] sm:$0xff]
    %v2540 = vld [vmem:[#allocation7 + $0x80] sm:$0xff]
    %v2541 = vld [vmem:[#allocation7 + $0x88] sm:$0xff]
    %v2542 = vld [vmem:[#allocation7 + $0x90] sm:$0xff]
    %v2543 = vld [vmem:[#allocation7 + $0x98] sm:$0xff]
    %v2544 = vld [vmem:[#allocation7 + $0xa0] sm:$0xff]
    %v2545 = vld [vmem:[#allocation7 + $0xa8] sm:$0xff]
    %v2546 = vld [vmem:[#allocation7 + $0xb0] sm:$0xff]
    %v2547 = vld [vmem:[#allocation7 + $0xb8] sm:$0xff]
    %v2548 = vld [vmem:[#allocation7 + $0xc0] sm:$0xff]
    %v2549 = vld [vmem:[#allocation7 + $0xc8] sm:$0xff]
    %v2550 = vld [vmem:[#allocation7 + $0xd0] sm:$0xff]
    %v2551 = vld [vmem:[#allocation7 + $0xd8] sm:$0xff]
    %v2552 = vld [vmem:[#allocation7 + $0xe0] sm:$0xff]
    %v2553 = vld [vmem:[#allocation7 + $0xe8] sm:$0xff]
    %v2554 = vld [vmem:[#allocation7 + $0xf0] sm:$0xff]
    %v2555 = vld [vmem:[#allocation7 + $0xf8] sm:$0xff]
    %v2557 = vlaneseq
    %v2558 = vshrl.u32 %v2557, 7
    %v2559 = vsub.s32 0, %v2558
    %v2560 = vrot.slane %v2507, %v2559
    %v2561 = vlaneseq
    %v2562 = vshrl.u32 %v2561, 7
    %v2563 = vsub.s32 1, %v2562
    %v2564 = vrot.slane %v2507, %v2563
    %v2599 = vunpack.c.l.b16 %v2524
    %v2600 = vunpack.c.h.b16 %v2524
    %v2601 = vunpack.c.l.b16 %v2525
    %v2602 = vunpack.c.h.b16 %v2525
    %v2603 = vunpack.c.l.b16 %v2526
    %v2604 = vunpack.c.h.b16 %v2526
    %v2605 = vunpack.c.l.b16 %v2527
    %v2606 = vunpack.c.h.b16 %v2527
    %v2607 = vunpack.c.l.b16 %v2528
    %v2608 = vunpack.c.h.b16 %v2528
    %v2609 = vunpack.c.l.b16 %v2529
    %v2610 = vunpack.c.h.b16 %v2529
    %v2611 = vunpack.c.l.b16 %v2530
    %v2612 = vunpack.c.h.b16 %v2530
    %v2613 = vunpack.c.l.b16 %v2531
    %v2614 = vunpack.c.h.b16 %v2531
    %v2615 = vunpack.c.l.b16 %v2532
    %v2616 = vunpack.c.h.b16 %v2532
    %v2617 = vunpack.c.l.b16 %v2533
    %v2618 = vunpack.c.h.b16 %v2533
    %v2619 = vunpack.c.l.b16 %v2534
    %v2620 = vunpack.c.h.b16 %v2534
    %v2621 = vunpack.c.l.b16 %v2535
    %v2622 = vunpack.c.h.b16 %v2535
    %v2623 = vunpack.c.l.b16 %v2536
    %v2624 = vunpack.c.h.b16 %v2536
    %v2625 = vunpack.c.l.b16 %v2537
    %v2626 = vunpack.c.h.b16 %v2537
    %v2627 = vunpack.c.l.b16 %v2538
    %v2628 = vunpack.c.h.b16 %v2538
    %v2629 = vunpack.c.l.b16 %v2539
    %v2630 = vunpack.c.h.b16 %v2539
    %v2631 = vunpack.c.l.b16 %v2540
    %v2632 = vunpack.c.h.b16 %v2540
    %v2633 = vunpack.c.l.b16 %v2541
    %v2634 = vunpack.c.h.b16 %v2541
    %v2635 = vunpack.c.l.b16 %v2542
    %v2636 = vunpack.c.h.b16 %v2542
    %v2637 = vunpack.c.l.b16 %v2543
    %v2638 = vunpack.c.h.b16 %v2543
    %v2639 = vunpack.c.l.b16 %v2544
    %v2640 = vunpack.c.h.b16 %v2544
    %v2641 = vunpack.c.l.b16 %v2545
    %v2642 = vunpack.c.h.b16 %v2545
    %v2643 = vunpack.c.l.b16 %v2546
    %v2644 = vunpack.c.h.b16 %v2546
    %v2645 = vunpack.c.l.b16 %v2547
    %v2646 = vunpack.c.h.b16 %v2547
    %v2647 = vunpack.c.l.b16 %v2548
    %v2648 = vunpack.c.h.b16 %v2548
    %v2649 = vunpack.c.l.b16 %v2549
    %v2650 = vunpack.c.h.b16 %v2549
    %v2651 = vunpack.c.l.b16 %v2550
    %v2652 = vunpack.c.h.b16 %v2550
    %v2653 = vunpack.c.l.b16 %v2551
    %v2654 = vunpack.c.h.b16 %v2551
    %v2655 = vunpack.c.l.b16 %v2552
    %v2656 = vunpack.c.h.b16 %v2552
    %v2657 = vunpack.c.l.b16 %v2553
    %v2658 = vunpack.c.h.b16 %v2553
    %v2659 = vunpack.c.l.b16 %v2554
    %v2660 = vunpack.c.h.b16 %v2554
    %v2661 = vunpack.c.l.b16 %v2555
    %v2662 = vunpack.c.h.b16 %v2555
    %v2663 = vpack.c.b16 %v2601, %v2599
    %v2664 = vpack.c.b16 %v2602, %v2600
    %v2665 = vpack.c.b16 %v2605, %v2603
    %v2666 = vpack.c.b16 %v2606, %v2604
    %v2667 = vpack.c.b16 %v2609, %v2607
    %v2668 = vpack.c.b16 %v2610, %v2608
    %v2669 = vpack.c.b16 %v2613, %v2611
    %v2670 = vpack.c.b16 %v2614, %v2612
    %v2671 = vpack.c.b16 %v2617, %v2615
    %v2672 = vpack.c.b16 %v2618, %v2616
    %v2673 = vpack.c.b16 %v2621, %v2619
    %v2674 = vpack.c.b16 %v2622, %v2620
    %v2675 = vpack.c.b16 %v2625, %v2623
    %v2676 = vpack.c.b16 %v2626, %v2624
    %v2677 = vpack.c.b16 %v2629, %v2627
    %v2678 = vpack.c.b16 %v2630, %v2628
    %v2679 = vpack.c.b16 %v2633, %v2631
    %v2680 = vpack.c.b16 %v2634, %v2632
    %v2681 = vpack.c.b16 %v2637, %v2635
    %v2682 = vpack.c.b16 %v2638, %v2636
    %v2683 = vpack.c.b16 %v2641, %v2639
    %v2684 = vpack.c.b16 %v2642, %v2640
    %v2685 = vpack.c.b16 %v2645, %v2643
    %v2686 = vpack.c.b16 %v2646, %v2644
    %v2687 = vpack.c.b16 %v2649, %v2647
    %v2688 = vpack.c.b16 %v2650, %v2648
    %v2689 = vpack.c.b16 %v2653, %v2651
    %v2690 = vpack.c.b16 %v2654, %v2652
    %v2691 = vpack.c.b16 %v2657, %v2655
    %v2692 = vpack.c.b16 %v2658, %v2656
    %v2693 = vpack.c.b16 %v2661, %v2659
    %v2694 = vpack.c.b16 %v2662, %v2660
    %2727 = vmatprep.subr.bf16.mxu0 %v2664
    %2728 = vmatpush1.bf16.msra.mxu0 %v2663
    %2729 = vmatprep.subr.bf16.mxu0 %v2666
    %2730 = vmatpush1.bf16.msra.mxu0 %v2665
    %2731 = vmatprep.subr.bf16.mxu0 %v2668
    %2732 = vmatpush1.bf16.msra.mxu0 %v2667
    %2733 = vmatprep.subr.bf16.mxu0 %v2670
    %2734 = vmatpush1.bf16.msra.mxu0 %v2669
    %2735 = vmatprep.subr.bf16.mxu0 %v2672
    %2736 = vmatpush1.bf16.msra.mxu0 %v2671
    %2737 = vmatprep.subr.bf16.mxu0 %v2674
    %2738 = vmatpush1.bf16.msra.mxu0 %v2673
    %2739 = vmatprep.subr.bf16.mxu0 %v2676
    %2740 = vmatpush1.bf16.msra.mxu0 %v2675
    %2741 = vmatprep.subr.bf16.mxu0 %v2678
    %2742 = vmatpush1.bf16.msra.mxu0 %v2677
    %2743 = vmatprep.subr.bf16.mxu0 %v2680
    %2744 = vmatpush1.bf16.msra.mxu0 %v2679
    %2745 = vmatprep.subr.bf16.mxu0 %v2682
    %2746 = vmatpush1.bf16.msra.mxu0 %v2681
    %2747 = vmatprep.subr.bf16.mxu0 %v2684
    %2748 = vmatpush1.bf16.msra.mxu0 %v2683
    %2749 = vmatprep.subr.bf16.mxu0 %v2686
    %2750 = vmatpush1.bf16.msra.mxu0 %v2685
    %2751 = vmatprep.subr.bf16.mxu0 %v2688
    %2752 = vmatpush1.bf16.msra.mxu0 %v2687
    %2753 = vmatprep.subr.bf16.mxu0 %v2690
    %2754 = vmatpush1.bf16.msra.mxu0 %v2689
    %2755 = vmatprep.subr.bf16.mxu0 %v2692
    %2756 = vmatpush1.bf16.msra.mxu0 %v2691
    %2757 = vmatprep.subr.bf16.mxu0 %v2694
    %2758 = vmatpush1.bf16.msra.mxu0 %v2693
    %2759 = vmatprep.mubr.bf16.mxu0 %v2509
    %2760 = vmatmul.mubr.bf16.gmra.mrb[0].mxu0 %v2508
    %v2761 = vpop.f32.mrb[0].mxu0
    %v2762 = vadd.f32 %v2560, %v2761
    %v2763 = vpop.f32.mrb[0].mxu0
    %v2764 = vadd.f32 %v2564, %v2763
    %v2765 = vpop.f32.mrb[0].mxu0
    %v2766 = vadd.f32 %v2560, %v2765
    %v2767 = vpop.f32.mrb[0].mxu0
    %v2768 = vadd.f32 %v2564, %v2767
    %2769 = vmatprep.mubr.bf16.mxu0 %v2511
    %2770 = vmatmul.mubr.bf16.gmra.mrb[0].mxu0 %v2510
    %v2771 = vpop.f32.mrb[0].mxu0
    %v2772 = vadd.f32 %v2560, %v2771
    %v2773 = vpop.f32.mrb[0].mxu0
    %v2774 = vadd.f32 %v2564, %v2773
    %v2775 = vpop.f32.mrb[0].mxu0
    %v2776 = vadd.f32 %v2560, %v2775
    %v2777 = vpop.f32.mrb[0].mxu0
    %v2778 = vadd.f32 %v2564, %v2777
    %2779 = vmatprep.mubr.bf16.mxu0 %v2513
    %2780 = vmatmul.mubr.bf16.gmra.mrb[0].mxu0 %v2512
    %v2781 = vpop.f32.mrb[0].mxu0
    %v2782 = vadd.f32 %v2560, %v2781
    %v2783 = vpop.f32.mrb[0].mxu0
    %v2784 = vadd.f32 %v2564, %v2783
    %v2785 = vpop.f32.mrb[0].mxu0
    %v2786 = vadd.f32 %v2560, %v2785
    %v2787 = vpop.f32.mrb[0].mxu0
    %v2788 = vadd.f32 %v2564, %v2787
    %2789 = vmatprep.mubr.bf16.mxu0 %v2515
    %2790 = vmatmul.mubr.bf16.gmra.mrb[0].mxu0 %v2514
    %v2791 = vpop.f32.mrb[0].mxu0
    %v2792 = vadd.f32 %v2560, %v2791
    %v2793 = vpop.f32.mrb[0].mxu0
    %v2794 = vadd.f32 %v2564, %v2793
    %v2795 = vpop.f32.mrb[0].mxu0
    %v2796 = vadd.f32 %v2560, %v2795
    %v2797 = vpop.f32.mrb[0].mxu0
    %v2798 = vadd.f32 %v2564, %v2797
    %2799 = vmatprep.mubr.bf16.mxu0 %v2517
    %2800 = vmatmul.mubr.bf16.gmra.mrb[0].mxu0 %v2516
    %v2801 = vpop.f32.mrb[0].mxu0
    %v2802 = vadd.f32 %v2560, %v2801
    %v2803 = vpop.f32.mrb[0].mxu0
    %v2804 = vadd.f32 %v2564, %v2803
    %v2805 = vpop.f32.mrb[0].mxu0
    %v2806 = vadd.f32 %v2560, %v2805
    %v2807 = vpop.f32.mrb[0].mxu0
    %v2808 = vadd.f32 %v2564, %v2807
    %2809 = vmatprep.mubr.bf16.mxu0 %v2519
    %2810 = vmatmul.mubr.bf16.gmra.mrb[0].mxu0 %v2518
    %v2811 = vpop.f32.mrb[0].mxu0
    %v2812 = vadd.f32 %v2560, %v2811
    %v2813 = vpop.f32.mrb[0].mxu0
    %v2814 = vadd.f32 %v2564, %v2813
    %v2815 = vpop.f32.mrb[0].mxu0
    %v2816 = vadd.f32 %v2560, %v2815
    %v2817 = vpop.f32.mrb[0].mxu0
    %v2818 = vadd.f32 %v2564, %v2817
    %2819 = vmatprep.mubr.bf16.mxu0 %v2521
    %2820 = vmatmul.mubr.bf16.gmra.mrb[0].mxu0 %v2520
    %v2821 = vpop.f32.mrb[0].mxu0
    %v2822 = vadd.f32 %v2560, %v2821
    %v2823 = vpop.f32.mrb[0].mxu0
    %v2824 = vadd.f32 %v2564, %v2823
    %v2825 = vpop.f32.mrb[0].mxu0
    %v2826 = vadd.f32 %v2560, %v2825
    %v2827 = vpop.f32.mrb[0].mxu0
    %v2828 = vadd.f32 %v2564, %v2827
    %2829 = vmatprep.mubr.bf16.mxu0 %v2523
    %2830 = vmatmul.mubr.bf16.gmra.mrb[0].mxu0 %v2522
    %v2831 = vpop.f32.mrb[0].mxu0
    %v2832 = vadd.f32 %v2560, %v2831
    %v2833 = vpop.f32.mrb[0].mxu0
    %v2834 = vadd.f32 %v2564, %v2833
    %v2835 = vpop.f32.mrb[0].mxu0
    %v2836 = vadd.f32 %v2560, %v2835
    %v2837 = vpop.f32.mrb[0].mxu0
    %v2838 = vadd.f32 %v2564, %v2837
    %2839 = vdwg.mxu0
    %v2840 = vmax.f32 %v2762, 0.0
    %v2841 = vmax.f32 %v2764, 0.0
    %v2842 = vmax.f32 %v2766, 0.0
    %v2843 = vmax.f32 %v2768, 0.0
    %v2844 = vmax.f32 %v2772, 0.0
    %v2845 = vmax.f32 %v2774, 0.0
    %v2846 = vmax.f32 %v2776, 0.0
    %v2847 = vmax.f32 %v2778, 0.0
    %v2848 = vmax.f32 %v2782, 0.0
    %v2849 = vmax.f32 %v2784, 0.0
    %v2850 = vmax.f32 %v2786, 0.0
    %v2851 = vmax.f32 %v2788, 0.0
    %v2852 = vmax.f32 %v2792, 0.0
    %v2853 = vmax.f32 %v2794, 0.0
    %v2854 = vmax.f32 %v2796, 0.0
    %v2855 = vmax.f32 %v2798, 0.0
    %v2856 = vmax.f32 %v2802, 0.0
    %v2857 = vmax.f32 %v2804, 0.0
    %v2858 = vmax.f32 %v2806, 0.0
    %v2859 = vmax.f32 %v2808, 0.0
    %v2860 = vmax.f32 %v2812, 0.0
    %v2861 = vmax.f32 %v2814, 0.0
    %v2862 = vmax.f32 %v2816, 0.0
    %v2863 = vmax.f32 %v2818, 0.0
    %v2864 = vmax.f32 %v2822, 0.0
    %v2865 = vmax.f32 %v2824, 0.0
    %v2866 = vmax.f32 %v2826, 0.0
    %v2867 = vmax.f32 %v2828, 0.0
    %v2868 = vmax.f32 %v2832, 0.0
    %v2869 = vmax.f32 %v2834, 0.0
    %v2870 = vmax.f32 %v2836, 0.0
    %v2871 = vmax.f32 %v2838, 0.0
    %v2872 = vld [vmem:[%s7 + $0xc] sm:$0x1]
    %v2873 = vpack.c.bf16 %v2842, %v2840
    %v2874 = vpack.c.bf16 %v2843, %v2841
    %v2875 = vpack.c.bf16 %v2846, %v2844
    %v2876 = vpack.c.bf16 %v2847, %v2845
    %v2877 = vpack.c.bf16 %v2850, %v2848
    %v2878 = vpack.c.bf16 %v2851, %v2849
    %v2879 = vpack.c.bf16 %v2854, %v2852
    %v2880 = vpack.c.bf16 %v2855, %v2853
    %v2881 = vpack.c.bf16 %v2858, %v2856
    %v2882 = vpack.c.bf16 %v2859, %v2857
    %v2883 = vpack.c.bf16 %v2862, %v2860
    %v2884 = vpack.c.bf16 %v2863, %v2861
    %v2885 = vpack.c.bf16 %v2866, %v2864
    %v2886 = vpack.c.bf16 %v2867, %v2865
    %v2887 = vpack.c.bf16 %v2870, %v2868
    %v2888 = vpack.c.bf16 %v2871, %v2869
    %v2889 = vld [vmem:[%s5] sm:$0xf]
    %v2890 = vld [vmem:[%s5 + $0x4] sm:$0xf]
    %v2891 = vld [vmem:[%s5 + $0x8] sm:$0xf]
    %v2892 = vld [vmem:[%s5 + $0xc] sm:$0xf]
    %v2893 = vld [vmem:[%s5 + $0x10] sm:$0xf]
    %v2894 = vld [vmem:[%s5 + $0x14] sm:$0xf]
    %v2895 = vld [vmem:[%s5 + $0x18] sm:$0xf]
    %v2896 = vld [vmem:[%s5 + $0x1c] sm:$0xf]
    %v2897 = vld [vmem:[%s5 + $0x20] sm:$0xf]
    %v2898 = vld [vmem:[%s5 + $0x24] sm:$0xf]
    %v2899 = vld [vmem:[%s5 + $0x28] sm:$0xf]
    %v2900 = vld [vmem:[%s5 + $0x2c] sm:$0xf]
    %v2901 = vld [vmem:[%s5 + $0x30] sm:$0xf]
    %v2902 = vld [vmem:[%s5 + $0x34] sm:$0xf]
    %v2903 = vld [vmem:[%s5 + $0x38] sm:$0xf]
    %v2904 = vld [vmem:[%s5 + $0x3c] sm:$0xf]
    %v2905 = vld [vmem:[%s5 + $0x40] sm:$0xf]
    %v2906 = vld [vmem:[%s5 + $0x44] sm:$0xf]
    %v2907 = vld [vmem:[%s5 + $0x48] sm:$0xf]
    %v2908 = vld [vmem:[%s5 + $0x4c] sm:$0xf]
    %v2909 = vld [vmem:[%s5 + $0x50] sm:$0xf]
    %v2910 = vld [vmem:[%s5 + $0x54] sm:$0xf]
    %v2911 = vld [vmem:[%s5 + $0x58] sm:$0xf]
    %v2912 = vld [vmem:[%s5 + $0x5c] sm:$0xf]
    %v2913 = vld [vmem:[%s5 + $0x60] sm:$0xf]
    %v2914 = vld [vmem:[%s5 + $0x64] sm:$0xf]
    %v2915 = vld [vmem:[%s5 + $0x68] sm:$0xf]
    %v2916 = vld [vmem:[%s5 + $0x6c] sm:$0xf]
    %v2917 = vld [vmem:[%s5 + $0x70] sm:$0xf]
    %v2918 = vld [vmem:[%s5 + $0x74] sm:$0xf]
    %v2919 = vld [vmem:[%s5 + $0x78] sm:$0xf]
    %v2920 = vld [vmem:[%s5 + $0x7c] sm:$0xf]
    %v2922 = vlaneseq
    %v2923 = vshrl.u32 %v2922, 7
    %v2924 = vsub.s32 0, %v2923
    %v2925 = vrot.slane %v2872, %v2924
    %v2959 = vunpack.c.l.b16 %v2889
    %v2960 = vunpack.c.l.b16 %v2890
    %v2961 = vunpack.c.l.b16 %v2891
    %v2962 = vunpack.c.l.b16 %v2892
    %v2963 = vunpack.c.l.b16 %v2893
    %v2964 = vunpack.c.l.b16 %v2894
    %v2965 = vunpack.c.l.b16 %v2895
    %v2966 = vunpack.c.l.b16 %v2896
    %v2967 = vunpack.c.l.b16 %v2897
    %v2968 = vunpack.c.l.b16 %v2898
    %v2969 = vunpack.c.l.b16 %v2899
    %v2970 = vunpack.c.l.b16 %v2900
    %v2971 = vunpack.c.l.b16 %v2901
    %v2972 = vunpack.c.l.b16 %v2902
    %v2973 = vunpack.c.l.b16 %v2903
    %v2974 = vunpack.c.l.b16 %v2904
    %v2975 = vunpack.c.l.b16 %v2905
    %v2976 = vunpack.c.l.b16 %v2906
    %v2977 = vunpack.c.l.b16 %v2907
    %v2978 = vunpack.c.l.b16 %v2908
    %v2979 = vunpack.c.l.b16 %v2909
    %v2980 = vunpack.c.l.b16 %v2910
    %v2981 = vunpack.c.l.b16 %v2911
    %v2982 = vunpack.c.l.b16 %v2912
    %v2983 = vunpack.c.l.b16 %v2913
    %v2984 = vunpack.c.l.b16 %v2914
    %v2985 = vunpack.c.l.b16 %v2915
    %v2986 = vunpack.c.l.b16 %v2916
    %v2987 = vunpack.c.l.b16 %v2917
    %v2988 = vunpack.c.l.b16 %v2918
    %v2989 = vunpack.c.l.b16 %v2919
    %v2990 = vunpack.c.l.b16 %v2920
    %v2991 = vpack.c.b16 %v2960, %v2959
    %v2992 = vpack.c.b16 %v2962, %v2961
    %v2993 = vpack.c.b16 %v2964, %v2963
    %v2994 = vpack.c.b16 %v2966, %v2965
    %v2995 = vpack.c.b16 %v2968, %v2967
    %v2996 = vpack.c.b16 %v2970, %v2969
    %v2997 = vpack.c.b16 %v2972, %v2971
    %v2998 = vpack.c.b16 %v2974, %v2973
    %v2999 = vpack.c.b16 %v2976, %v2975
    %v3000 = vpack.c.b16 %v2978, %v2977
    %v3001 = vpack.c.b16 %v2980, %v2979
    %v3002 = vpack.c.b16 %v2982, %v2981
    %v3003 = vpack.c.b16 %v2984, %v2983
    %v3004 = vpack.c.b16 %v2986, %v2985
    %v3005 = vpack.c.b16 %v2988, %v2987
    %v3006 = vpack.c.b16 %v2990, %v2989
    %3023 = vmatprep.subr.bf16.mxu0 0
    %3024 = vmatpush1.bf16.msra.mxu0 %v2991
    %3025 = vmatprep.subr.bf16.mxu0 0
    %3026 = vmatpush1.bf16.msra.mxu0 %v2992
    %3027 = vmatprep.subr.bf16.mxu0 0
    %3028 = vmatpush1.bf16.msra.mxu0 %v2993
    %3029 = vmatprep.subr.bf16.mxu0 0
    %3030 = vmatpush1.bf16.msra.mxu0 %v2994
    %3031 = vmatprep.subr.bf16.mxu0 0
    %3032 = vmatpush1.bf16.msra.mxu0 %v2995
    %3033 = vmatprep.subr.bf16.mxu0 0
    %3034 = vmatpush1.bf16.msra.mxu0 %v2996
    %3035 = vmatprep.subr.bf16.mxu0 0
    %3036 = vmatpush1.bf16.msra.mxu0 %v2997
    %3037 = vmatprep.subr.bf16.mxu0 0
    %3038 = vmatpush1.bf16.msra.mxu0 %v2998
    %3039 = vmatprep.subr.bf16.mxu0 0
    %3040 = vmatpush1.bf16.msra.mxu0 %v2999
    %3041 = vmatprep.subr.bf16.mxu0 0
    %3042 = vmatpush1.bf16.msra.mxu0 %v3000
    %3043 = vmatprep.subr.bf16.mxu0 0
    %3044 = vmatpush1.bf16.msra.mxu0 %v3001
    %3045 = vmatprep.subr.bf16.mxu0 0
    %3046 = vmatpush1.bf16.msra.mxu0 %v3002
    %3047 = vmatprep.subr.bf16.mxu0 0
    %3048 = vmatpush1.bf16.msra.mxu0 %v3003
    %3049 = vmatprep.subr.bf16.mxu0 0
    %3050 = vmatpush1.bf16.msra.mxu0 %v3004
    %3051 = vmatprep.subr.bf16.mxu0 0
    %3052 = vmatpush1.bf16.msra.mxu0 %v3005
    %3053 = vmatprep.subr.bf16.mxu0 0
    %3054 = vmatpush1.bf16.msra.mxu0 %v3006
    %3055 = vmatprep.mubr.bf16.mxu0 %v2874
    %3056 = vmatmul.mubr.bf16.gmra.mrb[0].mxu0 %v2873
    %v3057 = vpop.f32.mrb[0].mxu0
    %v3058 = vadd.f32 %v2925, %v3057
    %v3059 = vpop.f32.mrb[0].mxu0
    %v3060 = vpop.f32.mrb[0].mxu0
    %v3061 = vadd.f32 %v2925, %v3060
    %v3062 = vpop.f32.mrb[0].mxu0
    %3063 = vmatprep.mubr.bf16.mxu0 %v2876
    %3064 = vmatmul.mubr.bf16.gmra.mrb[0].mxu0 %v2875
    %v3065 = vpop.f32.mrb[0].mxu0
    %v3066 = vadd.f32 %v2925, %v3065
    %v3067 = vpop.f32.mrb[0].mxu0
    %v3068 = vpop.f32.mrb[0].mxu0
    %v3069 = vadd.f32 %v2925, %v3068
    %v3070 = vpop.f32.mrb[0].mxu0
    %3071 = vmatprep.mubr.bf16.mxu0 %v2878
    %3072 = vmatmul.mubr.bf16.gmra.mrb[0].mxu0 %v2877
    %v3073 = vpop.f32.mrb[0].mxu0
    %v3074 = vadd.f32 %v2925, %v3073
    %v3075 = vpop.f32.mrb[0].mxu0
    %v3076 = vpop.f32.mrb[0].mxu0
    %v3077 = vadd.f32 %v2925, %v3076
    %v3078 = vpop.f32.mrb[0].mxu0
    %3079 = vmatprep.mubr.bf16.mxu0 %v2880
    %3080 = vmatmul.mubr.bf16.gmra.mrb[0].mxu0 %v2879
    %v3081 = vpop.f32.mrb[0].mxu0
    %v3082 = vadd.f32 %v2925, %v3081
    %v3083 = vpop.f32.mrb[0].mxu0
    %v3084 = vpop.f32.mrb[0].mxu0
    %v3085 = vadd.f32 %v2925, %v3084
    %v3086 = vpop.f32.mrb[0].mxu0
    %3087 = vmatprep.mubr.bf16.mxu0 %v2882
    %3088 = vmatmul.mubr.bf16.gmra.mrb[0].mxu0 %v2881
    %v3089 = vpop.f32.mrb[0].mxu0
    %v3090 = vadd.f32 %v2925, %v3089
    %v3091 = vpop.f32.mrb[0].mxu0
    %v3092 = vpop.f32.mrb[0].mxu0
    %v3093 = vadd.f32 %v2925, %v3092
    %v3094 = vpop.f32.mrb[0].mxu0
    %3095 = vmatprep.mubr.bf16.mxu0 %v2884
    %3096 = vmatmul.mubr.bf16.gmra.mrb[0].mxu0 %v2883
    %v3097 = vpop.f32.mrb[0].mxu0
    %v3098 = vadd.f32 %v2925, %v3097
    %v3099 = vpop.f32.mrb[0].mxu0
    %v3100 = vpop.f32.mrb[0].mxu0
    %v3101 = vadd.f32 %v2925, %v3100
    %v3102 = vpop.f32.mrb[0].mxu0
    %3103 = vmatprep.mubr.bf16.mxu0 %v2886
    %3104 = vmatmul.mubr.bf16.gmra.mrb[0].mxu0 %v2885
    %v3105 = vpop.f32.mrb[0].mxu0
    %v3106 = vadd.f32 %v2925, %v3105
    %v3107 = vpop.f32.mrb[0].mxu0
    %v3108 = vpop.f32.mrb[0].mxu0
    %v3109 = vadd.f32 %v2925, %v3108
    %v3110 = vpop.f32.mrb[0].mxu0
    %3111 = vmatprep.mubr.bf16.mxu0 %v2888
    %3112 = vmatmul.mubr.bf16.gmra.mrb[0].mxu0 %v2887
    %v3113 = vpop.f32.mrb[0].mxu0
    %v3114 = vadd.f32 %v2925, %v3113
    %v3115 = vpop.f32.mrb[0].mxu0
    %v3116 = vpop.f32.mrb[0].mxu0
    %v3117 = vadd.f32 %v2925, %v3116
    %v3118 = vpop.f32.mrb[0].mxu0
    %3119 = vdwg.mxu0
    %v3120 = vmax.f32 %v3058, 0.0
    %v3121 = vmax.f32 %v3061, 0.0
    %v3122 = vmax.f32 %v3066, 0.0
    %v3123 = vmax.f32 %v3069, 0.0
    %v3124 = vmax.f32 %v3074, 0.0
    %v3125 = vmax.f32 %v3077, 0.0
    %v3126 = vmax.f32 %v3082, 0.0
    %v3127 = vmax.f32 %v3085, 0.0
    %v3128 = vmax.f32 %v3090, 0.0
    %v3129 = vmax.f32 %v3093, 0.0
    %v3130 = vmax.f32 %v3098, 0.0
    %v3131 = vmax.f32 %v3101, 0.0
    %v3132 = vmax.f32 %v3106, 0.0
    %v3133 = vmax.f32 %v3109, 0.0
    %v3134 = vmax.f32 %v3114, 0.0
    %v3135 = vmax.f32 %v3117, 0.0
    %v3136 = vld [vmem:[%s7 + $0xd] sm:$0x1]
    %v3137 = vpack.c.bf16 %v3121, %v3120
    %v3138 = vpack.c.bf16 %v3123, %v3122
    %v3139 = vpack.c.bf16 %v3125, %v3124
    %v3140 = vpack.c.bf16 %v3127, %v3126
    %v3141 = vpack.c.bf16 %v3129, %v3128
    %v3142 = vpack.c.bf16 %v3131, %v3130
    %v3143 = vpack.c.bf16 %v3133, %v3132
    %v3144 = vpack.c.bf16 %v3135, %v3134
    %v3145 = vld [vmem:[#allocation9] sm:$0xf]
    %v3146 = vld [vmem:[#allocation9 + $0x4] sm:$0xf]
    %v3147 = vld [vmem:[#allocation9 + $0x8] sm:$0xf]
    %v3148 = vld [vmem:[#allocation9 + $0xc] sm:$0xf]
    %v3149 = vld [vmem:[#allocation9 + $0x10] sm:$0xf]
    %v3150 = vld [vmem:[#allocation9 + $0x14] sm:$0xf]
    %v3151 = vld [vmem:[#allocation9 + $0x18] sm:$0xf]
    %v3152 = vld [vmem:[#allocation9 + $0x1c] sm:$0xf]
    %v3153 = vld [vmem:[#allocation9 + $0x20] sm:$0xf]
    %v3154 = vld [vmem:[#allocation9 + $0x24] sm:$0xf]
    %v3155 = vld [vmem:[#allocation9 + $0x28] sm:$0xf]
    %v3156 = vld [vmem:[#allocation9 + $0x2c] sm:$0xf]
    %v3157 = vld [vmem:[#allocation9 + $0x30] sm:$0xf]
    %v3158 = vld [vmem:[#allocation9 + $0x34] sm:$0xf]
    %v3159 = vld [vmem:[#allocation9 + $0x38] sm:$0xf]
    %v3160 = vld [vmem:[#allocation9 + $0x3c] sm:$0xf]
    %v3162 = vlaneseq
    %v3163 = vshrl.u32 %v3162, 7
    %v3164 = vsub.s32 0, %v3163
    %v3165 = vrot.slane %v3136, %v3164
    %v3183 = vunpack.c.l.b16 %v3145
    %v3184 = vunpack.c.l.b16 %v3146
    %v3185 = vunpack.c.l.b16 %v3147
    %v3186 = vunpack.c.l.b16 %v3148
    %v3187 = vunpack.c.l.b16 %v3149
    %v3188 = vunpack.c.l.b16 %v3150
    %v3189 = vunpack.c.l.b16 %v3151
    %v3190 = vunpack.c.l.b16 %v3152
    %v3191 = vunpack.c.l.b16 %v3153
    %v3192 = vunpack.c.l.b16 %v3154
    %v3193 = vunpack.c.l.b16 %v3155
    %v3194 = vunpack.c.l.b16 %v3156
    %v3195 = vunpack.c.l.b16 %v3157
    %v3196 = vunpack.c.l.b16 %v3158
    %v3197 = vunpack.c.l.b16 %v3159
    %v3198 = vunpack.c.l.b16 %v3160
    %v3199 = vpack.c.b16 %v3184, %v3183
    %v3200 = vpack.c.b16 %v3186, %v3185
    %v3201 = vpack.c.b16 %v3188, %v3187
    %v3202 = vpack.c.b16 %v3190, %v3189
    %v3203 = vpack.c.b16 %v3192, %v3191
    %v3204 = vpack.c.b16 %v3194, %v3193
    %v3205 = vpack.c.b16 %v3196, %v3195
    %v3206 = vpack.c.b16 %v3198, %v3197
    %3215 = vmatprep.subr.bf16.mxu0 0
    %3216 = vmatpush1.bf16.msra.mxu0 %v3199
    %3217 = vmatprep.subr.bf16.mxu0 0
    %3218 = vmatpush1.bf16.msra.mxu0 %v3200
    %3219 = vmatprep.subr.bf16.mxu0 0
    %3220 = vmatpush1.bf16.msra.mxu0 %v3201
    %3221 = vmatprep.subr.bf16.mxu0 0
    %3222 = vmatpush1.bf16.msra.mxu0 %v3202
    %3223 = vmatprep.subr.bf16.mxu0 0
    %3224 = vmatpush1.bf16.msra.mxu0 %v3203
    %3225 = vmatprep.subr.bf16.mxu0 0
    %3226 = vmatpush1.bf16.msra.mxu0 %v3204
    %3227 = vmatprep.subr.bf16.mxu0 0
    %3228 = vmatpush1.bf16.msra.mxu0 %v3205
    %3229 = vmatprep.subr.bf16.mxu0 0
    %3230 = vmatpush1.bf16.msra.mxu0 %v3206
    %3231 = vmatprep.subr.bf16.mxu0 0
    %3232 = vmatpush1.bf16.msra.mxu0 0
    %3233 = vmatprep.subr.bf16.mxu0 0
    %3234 = vmatpush1.bf16.msra.mxu0 0
    %3235 = vmatprep.subr.bf16.mxu0 0
    %3236 = vmatpush1.bf16.msra.mxu0 0
    %3237 = vmatprep.subr.bf16.mxu0 0
    %3238 = vmatpush1.bf16.msra.mxu0 0
    %3239 = vmatprep.subr.bf16.mxu0 0
    %3240 = vmatpush1.bf16.msra.mxu0 0
    %3241 = vmatprep.subr.bf16.mxu0 0
    %3242 = vmatpush1.bf16.msra.mxu0 0
    %3243 = vmatprep.subr.bf16.mxu0 0
    %3244 = vmatpush1.bf16.msra.mxu0 0
    %3245 = vmatprep.subr.bf16.mxu0 0
    %3246 = vmatpush1.bf16.msra.mxu0 0
    %3247 = vmatprep.mubr.bf16.mxu0 0
    %3248 = vmatmul.mubr.bf16.gmra.mrb[0].mxu0 %v3137
    %v3249 = vpop.f32.mrb[0].mxu0
    %v3250 = vadd.f32 %v3165, %v3249
    %v3251 = vpop.f32.mrb[0].mxu0
    %v3252 = vpop.f32.mrb[0].mxu0
    %v3253 = vadd.f32 %v3165, %v3252
    %v3254 = vpop.f32.mrb[0].mxu0
    %3255 = vmatprep.mubr.bf16.mxu0 0
    %3256 = vmatmul.mubr.bf16.gmra.mrb[0].mxu0 %v3138
    %v3257 = vpop.f32.mrb[0].mxu0
    %v3258 = vadd.f32 %v3165, %v3257
    %v3259 = vpop.f32.mrb[0].mxu0
    %v3260 = vpop.f32.mrb[0].mxu0
    %v3261 = vadd.f32 %v3165, %v3260
    %v3262 = vpop.f32.mrb[0].mxu0
    %3263 = vmatprep.mubr.bf16.mxu0 0
    %3264 = vmatmul.mubr.bf16.gmra.mrb[0].mxu0 %v3139
    %v3265 = vpop.f32.mrb[0].mxu0
    %v3266 = vadd.f32 %v3165, %v3265
    %v3267 = vpop.f32.mrb[0].mxu0
    %v3268 = vpop.f32.mrb[0].mxu0
    %v3269 = vadd.f32 %v3165, %v3268
    %v3270 = vpop.f32.mrb[0].mxu0
    %3271 = vmatprep.mubr.bf16.mxu0 0
    %3272 = vmatmul.mubr.bf16.gmra.mrb[0].mxu0 %v3140
    %v3273 = vpop.f32.mrb[0].mxu0
    %v3274 = vadd.f32 %v3165, %v3273
    %v3275 = vpop.f32.mrb[0].mxu0
    %v3276 = vpop.f32.mrb[0].mxu0
    %v3277 = vadd.f32 %v3165, %v3276
    %v3278 = vpop.f32.mrb[0].mxu0
    %3279 = vmatprep.mubr.bf16.mxu0 0
    %3280 = vmatmul.mubr.bf16.gmra.mrb[0].mxu0 %v3141
    %v3281 = vpop.f32.mrb[0].mxu0
    %v3282 = vadd.f32 %v3165, %v3281
    %v3283 = vpop.f32.mrb[0].mxu0
    %v3284 = vpop.f32.mrb[0].mxu0
    %v3285 = vadd.f32 %v3165, %v3284
    %v3286 = vpop.f32.mrb[0].mxu0
    %3287 = vmatprep.mubr.bf16.mxu0 0
    %3288 = vmatmul.mubr.bf16.gmra.mrb[0].mxu0 %v3142
    %v3289 = vpop.f32.mrb[0].mxu0
    %v3290 = vadd.f32 %v3165, %v3289
    %v3291 = vpop.f32.mrb[0].mxu0
    %v3292 = vpop.f32.mrb[0].mxu0
    %v3293 = vadd.f32 %v3165, %v3292
    %v3294 = vpop.f32.mrb[0].mxu0
    %3295 = vmatprep.mubr.bf16.mxu0 0
    %3296 = vmatmul.mubr.bf16.gmra.mrb[0].mxu0 %v3143
    %v3297 = vpop.f32.mrb[0].mxu0
    %v3298 = vadd.f32 %v3165, %v3297
    %v3299 = vpop.f32.mrb[0].mxu0
    %v3300 = vpop.f32.mrb[0].mxu0
    %v3301 = vadd.f32 %v3165, %v3300
    %v3302 = vpop.f32.mrb[0].mxu0
    %3303 = vmatprep.mubr.bf16.mxu0 0
    %3304 = vmatmul.mubr.bf16.gmra.mrb[0].mxu0 %v3144
    %v3305 = vpop.f32.mrb[0].mxu0
    %v3306 = vadd.f32 %v3165, %v3305
    %v3307 = vpop.f32.mrb[0].mxu0
    %v3308 = vpop.f32.mrb[0].mxu0
    %v3309 = vadd.f32 %v3165, %v3308
    %v3310 = vpop.f32.mrb[0].mxu0
    %3311 = vdwg.mxu0
    %3312 = vst [vmem:[%s8] sm:$0xff] %v3250
    %3313 = vst [vmem:[%s8 + $0x8] sm:$0xff] %v3253
    %3314 = vst [vmem:[%s8 + $0x10] sm:$0xff] %v3258
    %3315 = vst [vmem:[%s8 + $0x18] sm:$0xff] %v3261
    %3316 = vst [vmem:[%s8 + $0x20] sm:$0xff] %v3266
    %3317 = vst [vmem:[%s8 + $0x28] sm:$0xff] %v3269
    %3318 = vst [vmem:[%s8 + $0x30] sm:$0xff] %v3274
    %3319 = vst [vmem:[%s8 + $0x38] sm:$0xff] %v3277
    %3320 = vst [vmem:[%s8 + $0x40] sm:$0xff] %v3282
    %3321 = vst [vmem:[%s8 + $0x48] sm:$0xff] %v3285
    %3322 = vst [vmem:[%s8 + $0x50] sm:$0xff] %v3290
    %3323 = vst [vmem:[%s8 + $0x58] sm:$0xff] %v3293
    %3324 = vst [vmem:[%s8 + $0x60] sm:$0xff] %v3298
    %3325 = vst [vmem:[%s8 + $0x68] sm:$0xff] %v3301
    %3326 = vst [vmem:[%s8 + $0x70] sm:$0xff] %v3306
    %3327 = vst [vmem:[%s8 + $0x78] sm:$0xff] %v3309
    // Predicated region
    $region54: #{dqn_forward.1} parent=1 // pred_check
      _
    $region55: #{dqn_forward.1} parent=1 // pred_check_branch
      %3329 = sbr.rel (0) target = $region57
    $region56: #{dqn_forward.1} parent=1 // pred_region
      _
    $region57: #{dqn_forward.1} parent=1 // pred_fallthru
      _
    // Predicated region
    $region58: #{dqn_forward.1} parent=1 // pred_check
      _
    $region59: #{dqn_forward.1} parent=1 // pred_check_branch
      %3331 = sbr.rel (0) target = $region61
    $region60: #{dqn_forward.1} parent=1 // pred_region
      _
    $region61: #{dqn_forward.1} parent=1 // pred_fallthru
      _
    %3332 = vsyncpa [#allocation3], 1
    %3333 = vsyncpa [#allocation5], 1
    %3334 = vsyncpa [#allocation8], 1

</llo_original>
